<compile_context>
chip_gen: v7x
topology: tpu7x:2x2x1
jax: 0.10.0
libtpu: 0.0.40
codegen_flags: <defaults>
</compile_context>

<pallas_src>
import functools

import jax
import jax.numpy as jnp
from jax.experimental import pallas as pl
from jax.experimental.pallas import tpu as pltpu


def _round_up(x, m):
    return ((x + m - 1) // m) * m


# ---------------------------------------------------------------------------
# Kernel: patch-embed matmul -> LayerNorm (affine folded into head) ->
#         mean pool over patch tokens -> classifier head.  One batch tile per
#         grid step.
# ---------------------------------------------------------------------------

def _mean_pool_forward_kernel(ln_eps, inv_n,
                              patch_ref,   # [Bt, N, P] bf16 unfolded patches
                              we_ref,      # [P, D]     bf16 patch-embed weight
                              be_ref,      # [1, D]     f32  patch-embed bias
                              wh_ref,      # [D, NCp]   f32  head W (gamma folded, lane-padded)
                              bh_ref,      # [1, NCp]   f32  head b (beta  folded, lane-padded)
                              out_ref):    # [Bt, NCp]  f32  logits (lane-padded)
    Bt, N, P = patch_ref.shape
    D = we_ref.shape[1]

    # Patch embedding: conv(k=p, stride=p) == one MXU matmul with M = Bt*N
    # rows (bf16 inputs, f32 accumulation).
    x = patch_ref[...].reshape(Bt * N, P)
    tok = jnp.dot(x, we_ref[...], preferred_element_type=jnp.float32)
    tok = tok + be_ref[...]                                     # [Bt*N, D] f32

    # LayerNorm over the embedding dim (f32).  gamma/beta are folded into the
    # classifier weights in the wrapper, so only the normalization runs here.
    mu = jnp.mean(tok, axis=-1, keepdims=True)
    var = jnp.mean(jnp.square(tok - mu), axis=-1, keepdims=True)
    z = (tok - mu) * jax.lax.rsqrt(var + ln_eps)

    # Mean pool over the N patch tokens -> x_mean_pooling features (f32).
    feat = z.reshape(Bt, N, D).sum(axis=1) * inv_n              # [Bt, D]

    # Classifier head, batched over the tile; f32 LHS/RHS for accuracy
    # (head FLOPs are tiny next to the patch-embed matmul).  Dense,
    # lane-aligned (Bt, NCp) store.
    logits = jnp.dot(feat, wh_ref[...],
                     preferred_element_type=jnp.float32) + bh_ref[...]
    out_ref[...] = logits.astype(out_ref.dtype)
    # TODO(synk): for very large num_classes with small Bt, accumulate `feat`
    # into VMEM scratch across grid steps and run one big head matmul at the
    # last step (needs an "arbitrary" grid axis -> trades megacore parallelism).


# ---------------------------------------------------------------------------
# Wrapper helpers
# ---------------------------------------------------------------------------

def _vmem_budget_bytes():
    """Generation-aware VMEM ceiling (~96 MiB on v5e/v6e, ~48 MiB on v7x)."""
    try:
        cap = pltpu.get_tpu_info().vmem_capacity_bytes
    except Exception:
        cap = 64 * 1024 * 1024          # conservative: assume v7x-sized VMEM
    return int(cap) * 3 // 4            # headroom for compiler scratch


def _pick_batch_tile(B, N, P, D, NCp, requested, vmem_budget):
    """Largest batch tile (multiple of 8, preferably dividing B) whose
    per-step VMEM footprint fits the budget."""
    const_bytes = P * D * 2 + D * 4 + D * NCp * 4 + NCp * 4   # single-buffered weights

    def step_bytes(bt):
        patches = bt * N * P * 2 * 2        # bf16 patch stream, double-buffered
        out = bt * NCp * 4 * 2              # f32 logits, double-buffered
        interm = 3 * bt * N * D * 4         # f32 tok / z / pooling intermediates
        return const_bytes + patches + out + interm

    bt = max(1, min(requested, B))
    while bt > 1 and step_bytes(bt) > vmem_budget:
        bt //= 2
    if bt >= B:
        return B                            # single step, full-extent block
    bt = max(8, (bt // 8) * 8)              # output block sublane constraint
    for cand in range(bt, 7, -8):           # prefer a tile dividing B: no batch pad
        if B % cand == 0:
            return cand
    return bt


# ---------------------------------------------------------------------------
# Wrapper
# ---------------------------------------------------------------------------

def model_with_classifier(images, params, *, patch_size, use_cls=False,
                          batch_tile=32, ln_eps=1e-6):
    """images: [B, C, H, W] float32 (NCHW). Returns logits [B, num_classes]."""
    B, C, H, W = images.shape
    p = patch_size
    assert H % p == 0 and W % p == 0
    nh, nw = H // p, W // p
    N = nh * nw
    P = C * p * p

    we, be = params["w_embed"], params["b_embed"]
    cls_tok = params["cls_token"]
    gamma, beta = params["ln_gamma"], params["ln_beta"]
    wh, bh = params["w_head"], params["b_head"]
    D = we.shape[1]
    NC = wh.shape[1]

    if use_cls:
        # 'x_norm_clstoken' branch of this synthetic stand-in: the feature is
        # the LayerNormed learned cls token (image-independent), i.e. one
        # [1, D] LayerNorm plus a [1, D] x [D, NC] matmul.  An M=1 matmul is
        # not worth a Pallas launch — plain jnp, broadcast over the batch.
        t = cls_tok.astype(jnp.float32)
        mu = t.mean(-1, keepdims=True)
        var = jnp.square(t - mu).mean(-1, keepdims=True)
        tn = (t - mu) * jax.lax.rsqrt(var + ln_eps) * gamma + beta
        return jnp.broadcast_to(tn @ wh + bh, (B, NC))

    # Fold the LayerNorm affine into the classifier head:
    #   mean_N(z*gamma + beta) @ Wh + bh == mean_N(z) @ (gamma*Wh) + (beta@Wh + bh)
    # Lane-pad NC so the kernel's stores are dense multiples of 128.
    NCp = _round_up(NC, 128)
    wh_f = (gamma.reshape(-1, 1) * wh).astype(jnp.float32)
    bh_f = (beta @ wh + bh).astype(jnp.float32)
    wh_f = jnp.pad(wh_f, ((0, 0), (0, NCp - NC)))
    bh_f = jnp.pad(bh_f, ((0, 0), (0, NCp - NC)))

    # Unfold non-overlapping patches -> [B, N, C*p*p] ((C, p, p) flattening
    # matches nn.Conv2d patch-embed weights), cast to bf16 for the MXU.  The
    # patch-feature dim is NOT zero-padded in HBM: the kernel DMAs the full
    # last dim (legal when the block dim equals the array dim), which removes
    # one whole HBM read+write over the patch tensor.
    # TODO(synk): fusing this unfold (one XLA transpose+cast copy) into the
    # kernel's index_map/DMA would remove the remaining extra HBM pass.
    patches = images.reshape(B, C, nh, p, nw, p)
    patches = patches.transpose(0, 2, 4, 1, 3, 5).reshape(B, N, P)
    patches = patches.astype(jnp.bfloat16)
    we_b = we.astype(jnp.bfloat16)
    be_f = be.astype(jnp.float32)

    # Generation-aware VMEM budget and batch tile (bigger tile = better MXU
    # fill; v7x has half the VMEM of v5e/v6e so the cap differs per chip).
    vmem_budget = _vmem_budget_bytes()
    Bt = _pick_batch_tile(B, N, P, D, NCp, batch_tile, vmem_budget)
    Bp = _round_up(B, Bt)
    if Bp != B:
        # Padded rows produce (tok - mu) == 0 exactly, so LayerNorm stays
        # finite via ln_eps; the rows are sliced off below.
        patches = jnp.pad(patches, ((0, Bp - B), (0, 0), (0, 0)))

    def run(single_buffer_weights):
        wmode = {"pipeline_mode": pl.Buffered(1)} if single_buffer_weights else {}
        return pl.pallas_call(
            functools.partial(_mean_pool_forward_kernel, ln_eps, 1.0 / N),
            out_shape=jax.ShapeDtypeStruct((Bp, NCp), jnp.float32),
            grid_spec=pltpu.PrefetchScalarGridSpec(
                num_scalar_prefetch=0,
                grid=(Bp // Bt,),
                in_specs=[
                    # Per-step patch stream (dominant HBM traffic); default
                    # double-buffering.  With real image sizes and VMEM
                    # headroom, sweep pipeline_mode=pl.Buffered(3) here.
                    pl.BlockSpec((Bt, N, P), lambda b: (b, 0, 0)),
                    # Grid-invariant operands: single-buffered to halve their
                    # VMEM footprint (buys a larger Bt, esp. on v7x).
                    pl.BlockSpec((P, D), lambda b: (0, 0), **wmode),     # patch-embed W
                    pl.BlockSpec((1, D), lambda b: (0, 0), **wmode),     # patch-embed b
                    pl.BlockSpec((D, NCp), lambda b: (0, 0), **wmode),   # head W (gamma folded)
                    pl.BlockSpec((1, NCp), lambda b: (0, 0), **wmode),   # head b (beta folded)
                ],
                out_specs=pl.BlockSpec((Bt, NCp), lambda b: (b, 0)),
            ),
            compiler_params=pltpu.CompilerParams(
                dimension_semantics=("parallel",),
                vmem_limit_bytes=vmem_budget),
        )(patches, we_b, be_f, wh_f, bh_f)

    try:
        out = run(single_buffer_weights=True)
    except Exception:
        # TODO(synk): some jax versions reject pipeline_mode on a top-level
        # pallas_call; fall back to default double-buffering (same results,
        # just wastes VMEM on the grid-invariant weights).
        out = run(single_buffer_weights=False)

    return out[:B, :NC]


# ---------------------------------------------------------------------------
# Reference (pure JAX) + params
# ---------------------------------------------------------------------------

def _reference_forward(images, params, *, patch_size, use_cls=False, ln_eps=1e-6):
    B, C, H, W = images.shape
    p = patch_size
    nh, nw = H // p, W // p
    patches = images.reshape(B, C, nh, p, nw, p).transpose(0, 2, 4, 1, 3, 5)
    patches = patches.reshape(B, nh * nw, C * p * p)

    def ln(x):
        mu = x.mean(-1, keepdims=True)
        var = ((x - mu) ** 2).mean(-1, keepdims=True)
        return ((x - mu) / jnp.sqrt(var + ln_eps)) * params["ln_gamma"] + params["ln_beta"]

    if use_cls:
        feat = jnp.broadcast_to(ln(params["cls_token"]),
                                (B, params["w_embed"].shape[1]))
    else:
        tok = patches @ params["w_embed"] + params["b_embed"]
        feat = ln(tok).mean(axis=1)
    return feat @ params["w_head"] + params["b_head"]


def init_params(key, *, in_chans, patch_size, embed_dim, num_classes):
    """Deterministic synthetic parameters (no checkpoint loading)."""
    P = in_chans * patch_size * patch_size
    k = jax.random.split(key, 5)
    return {
        "w_embed":  0.02 * jax.random.normal(k[0], (P, embed_dim), jnp.float32),
        "b_embed":  jnp.zeros((1, embed_dim), jnp.float32),
        "cls_token": 0.02 * jax.random.normal(k[1], (1, embed_dim), jnp.float32),
        "ln_gamma": jnp.ones((1, embed_dim), jnp.float32),
        "ln_beta":  jnp.zeros((1, embed_dim), jnp.float32),
        "w_head":   0.02 * jax.random.normal(k[2], (embed_dim, num_classes), jnp.float32),
        "b_head":   jnp.zeros((1, num_classes), jnp.float32),
    }


if __name__ == "__main__":
    # NCHW images, ViT-style patch embed.  B=64 with batch_tile=16 -> grid
    # length 4 (>=2 pipelined steps per v7x TensorCore), patch-embed matmul
    # M = Bt*N = 256.
    B, C, H, W = 64, 4, 16, 16
    patch_size = 4
    embed_dim = 128
    num_classes = 16

    key = jax.random.PRNGKey(0)
    k_img, k_par = jax.random.split(key)
    images = jax.random.normal(k_img, (B, C, H, W), jnp.float32)
    params = init_params(k_par, in_chans=C, patch_size=patch_size,
                         embed_dim=embed_dim, num_classes=num_classes)

    # Default path of ModelWithClassifier: use_cls=False -> x_mean_pooling.
    # TODO(synk): use_multi_stage_feat (multi-stage feature concat) depends on
    # the backbone's intermediate layers and is not modeled here.
    logits = model_with_classifier(images, params, patch_size=patch_size,
                                   use_cls=False, batch_tile=16)
    jax.block_until_ready(logits)
    assert logits.shape == (B, num_classes)
    ref = _reference_forward(images, params, patch_size=patch_size, use_cls=False)
    assert jnp.allclose(logits, ref, rtol=5e-2, atol=5e-2)

    # use_cls=True path: x_norm_clstoken features (image-independent in this
    # synthetic stand-in); handled in plain jnp, no Pallas launch.
    logits_cls = model_with_classifier(images, params, patch_size=patch_size,
                                       use_cls=True)
    jax.block_until_ready(logits_cls)
    assert logits_cls.shape == (B, num_classes)
    ref_cls = _reference_forward(images, params, patch_size=patch_size, use_cls=True)
    assert jnp.allclose(logits_cls, ref_cls, rtol=5e-2, atol=5e-2)

    print("KERNEL_OK")
</pallas_src>

<mosaic_0001>
module attributes {stable_mosaic.version = 11 : i64} {
  func.func @_mean_pool_forward_kernel(%arg0: i32, %arg1: memref<16x16x64xbf16, #tpu.memory_space<vmem>>, %arg2: memref<64x128xbf16, #tpu.memory_space<vmem>>, %arg3: memref<1x128xf32, #tpu.memory_space<vmem>>, %arg4: memref<128x128xf32, #tpu.memory_space<vmem>>, %arg5: memref<1x128xf32, #tpu.memory_space<vmem>>, %arg6: memref<16x128xf32, #tpu.memory_space<vmem>>) attributes {dimension_semantics = [#tpu.dimension_semantics<parallel>], iteration_bounds = array<i64: 4>, scalar_prefetch = 0 : i64, scratch_operands = 0 : i64, tpu.core_type = #tpu.core_type<tc>, window_params = [{transform_indices = @transform_0, window_bounds = array<i64: 16, 16, 64>}, {pipeline_mode = #tpu.pipeline_mode<synchronous>, transform_indices = @transform_1, window_bounds = array<i64: 64, 128>}, {pipeline_mode = #tpu.pipeline_mode<synchronous>, transform_indices = @transform_2, window_bounds = array<i64: 1, 128>}, {pipeline_mode = #tpu.pipeline_mode<synchronous>, transform_indices = @transform_3, window_bounds = array<i64: 128, 128>}, {pipeline_mode = #tpu.pipeline_mode<synchronous>, transform_indices = @transform_4, window_bounds = array<i64: 1, 128>}, {transform_indices = @transform_5, window_bounds = array<i64: 16, 128>}]} {
    %c0 = arith.constant 0 : index
    %c0_0 = arith.constant 0 : index
    %c0_1 = arith.constant 0 : index
    %0 = vector.load %arg1[%c0, %c0_0, %c0_1] : memref<16x16x64xbf16, #tpu.memory_space<vmem>>, vector<16x16x64xbf16>
    %1 = vector.shape_cast %0 : vector<16x16x64xbf16> to vector<256x64xbf16>
    %c0_2 = arith.constant 0 : index
    %c0_3 = arith.constant 0 : index
    %2 = vector.load %arg2[%c0_2, %c0_3] : memref<64x128xbf16, #tpu.memory_space<vmem>>, vector<64x128xbf16>
    %cst = arith.constant dense<0.000000e+00> : vector<256x128xf32>
    %3 = tpu.matmul %1, %2, %cst {dimension_numbers = #tpu.dot_dimension_numbers<[1], [0], [0], [1], [0, 0, 1, 1], [], []>} : vector<256x64xbf16>, vector<64x128xbf16>, vector<256x128xf32> -> vector<256x128xf32>
    %c0_4 = arith.constant 0 : index
    %c0_5 = arith.constant 0 : index
    %4 = vector.load %arg3[%c0_4, %c0_5] : memref<1x128xf32, #tpu.memory_space<vmem>>, vector<1x128xf32>
    %5 = vector.broadcast %4 : vector<1x128xf32> to vector<256x128xf32>
    %6 = arith.addf %3, %5 : vector<256x128xf32>
    %cst_6 = arith.constant dense<0.000000e+00> : vector<256xf32>
    %7 = vector.multi_reduction <add>, %6, %cst_6 [1] : vector<256x128xf32> to vector<256xf32>
    %8 = vector.shape_cast %7 : vector<256xf32> to vector<256x1xf32>
    %cst_7 = arith.constant 1.280000e+02 : f32
    %9 = vector.broadcast %cst_7 : f32 to vector<256x1xf32>
    %10 = arith.divf %8, %9 : vector<256x1xf32>
    %11 = vector.broadcast %10 : vector<256x1xf32> to vector<256x128xf32>
    %12 = arith.subf %6, %11 : vector<256x128xf32>
    %13 = arith.mulf %12, %12 : vector<256x128xf32>
    %cst_8 = arith.constant dense<0.000000e+00> : vector<256xf32>
    %14 = vector.multi_reduction <add>, %13, %cst_8 [1] : vector<256x128xf32> to vector<256xf32>
    %15 = vector.shape_cast %14 : vector<256xf32> to vector<256x1xf32>
    %cst_9 = arith.constant 1.280000e+02 : f32
    %16 = vector.broadcast %cst_9 : f32 to vector<256x1xf32>
    %17 = arith.divf %15, %16 : vector<256x1xf32>
    %18 = vector.broadcast %10 : vector<256x1xf32> to vector<256x128xf32>
    %19 = arith.subf %6, %18 : vector<256x128xf32>
    %cst_10 = arith.constant 9.99999997E-7 : f32
    %20 = vector.broadcast %cst_10 : f32 to vector<256x1xf32>
    %21 = arith.addf %17, %20 : vector<256x1xf32>
    %22 = math.rsqrt %21 : vector<256x1xf32>
    %23 = vector.broadcast %22 : vector<256x1xf32> to vector<256x128xf32>
    %24 = arith.mulf %19, %23 : vector<256x128xf32>
    %25 = vector.shape_cast %24 : vector<256x128xf32> to vector<16x16x128xf32>
    %cst_11 = arith.constant dense<0.000000e+00> : vector<16x128xf32>
    %26 = vector.multi_reduction <add>, %25, %cst_11 [1] : vector<16x16x128xf32> to vector<16x128xf32>
    %cst_12 = arith.constant 6.250000e-02 : f32
    %27 = vector.broadcast %cst_12 : f32 to vector<16x128xf32>
    %28 = arith.mulf %26, %27 : vector<16x128xf32>
    %c0_13 = arith.constant 0 : index
    %c0_14 = arith.constant 0 : index
    %29 = vector.load %arg4[%c0_13, %c0_14] : memref<128x128xf32, #tpu.memory_space<vmem>>, vector<128x128xf32>
    %cst_15 = arith.constant dense<0.000000e+00> : vector<16x128xf32>
    %30 = tpu.matmul %28, %29, %cst_15 {dimension_numbers = #tpu.dot_dimension_numbers<[1], [0], [0], [1], [0, 0, 1, 1], [], []>} : vector<16x128xf32>, vector<128x128xf32>, vector<16x128xf32> -> vector<16x128xf32>
    %c0_16 = arith.constant 0 : index
    %c0_17 = arith.constant 0 : index
    %31 = vector.load %arg5[%c0_16, %c0_17] : memref<1x128xf32, #tpu.memory_space<vmem>>, vector<1x128xf32>
    %32 = vector.broadcast %31 : vector<1x128xf32> to vector<16x128xf32>
    %33 = arith.addf %30, %32 : vector<16x128xf32>
    %c0_18 = arith.constant 0 : index
    %c0_19 = arith.constant 0 : index
    %34 = vector.load %arg6[%c0_18, %c0_19] : memref<16x128xf32, #tpu.memory_space<vmem>>, vector<16x128xf32>
    tpu.vector_store %arg6[%c0_18, %c0_19], %33 {strides = array<i32>} : memref<16x128xf32, #tpu.memory_space<vmem>>, vector<16x128xf32>,
    return
  }
  func.func @transform_0(%arg0: i32) -> (i32, i32, i32) {
    %c0_i32 = arith.constant 0 : i32
    %c0_i32_0 = arith.constant 0 : i32
    %c0_i32_1 = arith.constant 0 : i32
    return %arg0, %c0_i32, %c0_i32_0 : i32, i32, i32
  }
  func.func @transform_1(%arg0: i32) -> (i32, i32) {
    %c0_i32 = arith.constant 0 : i32
    %c0_i32_0 = arith.constant 0 : i32
    %c0_i32_1 = arith.constant 0 : i32
    return %c0_i32, %c0_i32_0 : i32, i32
  }
  func.func @transform_2(%arg0: i32) -> (i32, i32) {
    %c0_i32 = arith.constant 0 : i32
    %c0_i32_0 = arith.constant 0 : i32
    %c0_i32_1 = arith.constant 0 : i32
    return %c0_i32, %c0_i32_0 : i32, i32
  }
  func.func @transform_3(%arg0: i32) -> (i32, i32) {
    %c0_i32 = arith.constant 0 : i32
    %c0_i32_0 = arith.constant 0 : i32
    %c0_i32_1 = arith.constant 0 : i32
    return %c0_i32, %c0_i32_0 : i32, i32
  }
  func.func @transform_4(%arg0: i32) -> (i32, i32) {
    %c0_i32 = arith.constant 0 : i32
    %c0_i32_0 = arith.constant 0 : i32
    %c0_i32_1 = arith.constant 0 : i32
    return %c0_i32, %c0_i32_0 : i32, i32
  }
  func.func @transform_5(%arg0: i32) -> (i32, i32) {
    %c0_i32 = arith.constant 0 : i32
    %c0_i32_0 = arith.constant 0 : i32
    return %arg0, %c0_i32 : i32, i32
  }
}

module attributes {stable_mosaic.version = 11 : i64} {
  func.func @_mean_pool_forward_kernel(%arg0: i32, %arg1: memref<16x16x64xbf16, #tpu.memory_space<vmem>>, %arg2: memref<64x128xbf16, #tpu.memory_space<vmem>>, %arg3: memref<1x128xf32, #tpu.memory_space<vmem>>, %arg4: memref<128x128xf32, #tpu.memory_space<vmem>>, %arg5: memref<1x128xf32, #tpu.memory_space<vmem>>, %arg6: memref<16x128xf32, #tpu.memory_space<vmem>>) attributes {dimension_semantics = [#tpu.dimension_semantics<parallel>], iteration_bounds = array<i64: 4>, scalar_prefetch = 0 : i64, scratch_operands = 0 : i64, tpu.core_type = #tpu.core_type<tc>, window_params = [{transform_indices = @transform_0, window_bounds = array<i64: 16, 16, 64>}, {pipeline_mode = #tpu.pipeline_mode<synchronous>, transform_indices = @transform_1, window_bounds = array<i64: 64, 128>}, {pipeline_mode = #tpu.pipeline_mode<synchronous>, transform_indices = @transform_2, window_bounds = array<i64: 1, 128>}, {pipeline_mode = #tpu.pipeline_mode<synchronous>, transform_indices = @transform_3, window_bounds = array<i64: 128, 128>}, {pipeline_mode = #tpu.pipeline_mode<synchronous>, transform_indices = @transform_4, window_bounds = array<i64: 1, 128>}, {transform_indices = @transform_5, window_bounds = array<i64: 16, 128>}]} {
    %c0 = arith.constant 0 : index
    %c0_0 = arith.constant 0 : index
    %c0_1 = arith.constant 0 : index
    %0 = vector.load %arg1[%c0, %c0_0, %c0_1] : memref<16x16x64xbf16, #tpu.memory_space<vmem>>, vector<16x16x64xbf16>
    %1 = vector.shape_cast %0 : vector<16x16x64xbf16> to vector<256x64xbf16>
    %c0_2 = arith.constant 0 : index
    %c0_3 = arith.constant 0 : index
    %2 = vector.load %arg2[%c0_2, %c0_3] : memref<64x128xbf16, #tpu.memory_space<vmem>>, vector<64x128xbf16>
    %cst = arith.constant dense<0.000000e+00> : vector<256x128xf32>
    %3 = tpu.matmul %1, %2, %cst {dimension_numbers = #tpu.dot_dimension_numbers<[1], [0], [0], [1], [0, 0, 1, 1], [], []>} : vector<256x64xbf16>, vector<64x128xbf16>, vector<256x128xf32> -> vector<256x128xf32>
    %c0_4 = arith.constant 0 : index
    %c0_5 = arith.constant 0 : index
    %4 = vector.load %arg3[%c0_4, %c0_5] : memref<1x128xf32, #tpu.memory_space<vmem>>, vector<1x128xf32>
    %5 = vector.broadcast %4 : vector<1x128xf32> to vector<256x128xf32>
    %6 = arith.addf %3, %5 : vector<256x128xf32>
    %cst_6 = arith.constant dense<0.000000e+00> : vector<256xf32>
    %7 = vector.multi_reduction <add>, %6, %cst_6 [1] : vector<256x128xf32> to vector<256xf32>
    %8 = vector.shape_cast %7 : vector<256xf32> to vector<256x1xf32>
    %cst_7 = arith.constant 1.280000e+02 : f32
    %9 = vector.broadcast %cst_7 : f32 to vector<256x1xf32>
    %10 = arith.divf %8, %9 : vector<256x1xf32>
    %11 = vector.broadcast %10 : vector<256x1xf32> to vector<256x128xf32>
    %12 = arith.subf %6, %11 : vector<256x128xf32>
    %13 = arith.mulf %12, %12 : vector<256x128xf32>
    %cst_8 = arith.constant dense<0.000000e+00> : vector<256xf32>
    %14 = vector.multi_reduction <add>, %13, %cst_8 [1] : vector<256x128xf32> to vector<256xf32>
    %15 = vector.shape_cast %14 : vector<256xf32> to vector<256x1xf32>
    %cst_9 = arith.constant 1.280000e+02 : f32
    %16 = vector.broadcast %cst_9 : f32 to vector<256x1xf32>
    %17 = arith.divf %15, %16 : vector<256x1xf32>
    %18 = vector.broadcast %10 : vector<256x1xf32> to vector<256x128xf32>
    %19 = arith.subf %6, %18 : vector<256x128xf32>
    %cst_10 = arith.constant 9.99999997E-7 : f32
    %20 = vector.broadcast %cst_10 : f32 to vector<256x1xf32>
    %21 = arith.addf %17, %20 : vector<256x1xf32>
    %22 = math.rsqrt %21 : vector<256x1xf32>
    %23 = vector.broadcast %22 : vector<256x1xf32> to vector<256x128xf32>
    %24 = arith.mulf %19, %23 : vector<256x128xf32>
    %25 = vector.shape_cast %24 : vector<256x128xf32> to vector<16x16x128xf32>
    %cst_11 = arith.constant dense<0.000000e+00> : vector<16x128xf32>
    %26 = vector.multi_reduction <add>, %25, %cst_11 [1] : vector<16x16x128xf32> to vector<16x128xf32>
    %cst_12 = arith.constant 6.250000e-02 : f32
    %27 = vector.broadcast %cst_12 : f32 to vector<16x128xf32>
    %28 = arith.mulf %26, %27 : vector<16x128xf32>
    %c0_13 = arith.constant 0 : index
    %c0_14 = arith.constant 0 : index
    %29 = vector.load %arg4[%c0_13, %c0_14] : memref<128x128xf32, #tpu.memory_space<vmem>>, vector<128x128xf32>
    %cst_15 = arith.constant dense<0.000000e+00> : vector<16x128xf32>
    %30 = tpu.matmul %28, %29, %cst_15 {dimension_numbers = #tpu.dot_dimension_numbers<[1], [0], [0], [1], [0, 0, 1, 1], [], []>} : vector<16x128xf32>, vector<128x128xf32>, vector<16x128xf32> -> vector<16x128xf32>
    %c0_16 = arith.constant 0 : index
    %c0_17 = arith.constant 0 : index
    %31 = vector.load %arg5[%c0_16, %c0_17] : memref<1x128xf32, #tpu.memory_space<vmem>>, vector<1x128xf32>
    %32 = vector.broadcast %31 : vector<1x128xf32> to vector<16x128xf32>
    %33 = arith.addf %30, %32 : vector<16x128xf32>
    %c0_18 = arith.constant 0 : index
    %c0_19 = arith.constant 0 : index
    %34 = vector.load %arg6[%c0_18, %c0_19] : memref<16x128xf32, #tpu.memory_space<vmem>>, vector<16x128xf32>
    tpu.vector_store %arg6[%c0_18, %c0_19], %33 {strides = array<i32>} : memref<16x128xf32, #tpu.memory_space<vmem>>, vector<16x128xf32>,
    return
  }
  func.func @transform_0(%arg0: i32) -> (i32, i32, i32) {
    %c0_i32 = arith.constant 0 : i32
    %c0_i32_0 = arith.constant 0 : i32
    %c0_i32_1 = arith.constant 0 : i32
    return %arg0, %c0_i32, %c0_i32_0 : i32, i32, i32
  }
  func.func @transform_1(%arg0: i32) -> (i32, i32) {
    %c0_i32 = arith.constant 0 : i32
    %c0_i32_0 = arith.constant 0 : i32
    %c0_i32_1 = arith.constant 0 : i32
    return %c0_i32, %c0_i32_0 : i32, i32
  }
  func.func @transform_2(%arg0: i32) -> (i32, i32) {
    %c0_i32 = arith.constant 0 : i32
    %c0_i32_0 = arith.constant 0 : i32
    %c0_i32_1 = arith.constant 0 : i32
    return %c0_i32, %c0_i32_0 : i32, i32
  }
  func.func @transform_3(%arg0: i32) -> (i32, i32) {
    %c0_i32 = arith.constant 0 : i32
    %c0_i32_0 = arith.constant 0 : i32
    %c0_i32_1 = arith.constant 0 : i32
    return %c0_i32, %c0_i32_0 : i32, i32
  }
  func.func @transform_4(%arg0: i32) -> (i32, i32) {
    %c0_i32 = arith.constant 0 : i32
    %c0_i32_0 = arith.constant 0 : i32
    %c0_i32_1 = arith.constant 0 : i32
    return %c0_i32, %c0_i32_0 : i32, i32
  }
  func.func @transform_5(%arg0: i32) -> (i32, i32) {
    %c0_i32 = arith.constant 0 : i32
    %c0_i32_0 = arith.constant 0 : i32
    return %arg0, %c0_i32 : i32, i32
  }
}

</mosaic_0001>

<llo_original>
// kernel: tpu_custom_call.1
$region0: #{tpu_custom_call.1}
  #allocation0 [shape = 'u32[]', space=smem, size = 0x4, offset = 0x4, fixed_abs, tag = 'smem constant byte address 0x4 - core index']
  #allocation1 [shape = 'u32[144,128]{1,0:T(1,128)}', space=vmem, size = 0x12000, scoped, tag = 'internal scratch']
  %s0 = inlined_call_operand.hbm [shape: bf16[64,16,64], index: 0, kind: input, shape index: {}]
  %s1 = inlined_call_operand.hbm [shape: bf16[64,128], index: 1, kind: input, shape index: {}]
  %s2 = inlined_call_operand.vmem [shape: f32[1,128], index: 2, kind: input, shape index: {}]
  %s3 = inlined_call_operand.hbm [shape: f32[128,128], index: 3, kind: input, shape index: {}]
  %s4 = inlined_call_operand.vmem [shape: f32[1,128], index: 4, kind: input, shape index: {}]
  %s5 = inlined_call_operand.hbm [shape: f32[64,128], index: 5, kind: output, shape index: {}]
  %s6 = sld [smem:[#allocation0]]
  $region65: #{tpu_custom_call.1} parent=0
    _
  %s8 = ssub.s32 1, %s6
  %s9 = scalar_select 0, %s8, %s6
  $region1: #{tpu_custom_call.1} parent=0
    #allocation2 [shape = 'u8[131072]{0}', space=vmem, size = 0x20000, scoped, tag = 'input window, operand 0']
    #allocation3 [shape = 's32[2]{0}', space=sflag, size = 0x8, scoped, tag = 'scoped memory for tpu_custom_call.1']
    #allocation4 [shape = 's32[2]{0}', space=sflag, size = 0x8, scoped, tag = 'scoped memory for tpu_custom_call.1']
    #allocation5 [shape = 'u8[16384]{0}', space=vmem, size = 0x4000, scoped, tag = 'input window, operand 1, single buffered']
    #allocation6 [shape = 's32[1]{0}', space=sflag, size = 0x4, scoped, tag = 'scoped memory for tpu_custom_call.1']
    #allocation7 [shape = 'u8[65536]{0}', space=vmem, size = 0x10000, scoped, tag = 'input window, operand 3, single buffered']
    #allocation8 [shape = 'u8[16384]{0}', space=vmem, size = 0x4000, scoped, tag = 'output window, operand 0']
    %10 = vsyncpa [#allocation3], 0
    %s11 = scalar_lea.sflag [#allocation3], 1
    %12 = vsyncpa %s11, 0
    %13 = vsyncpa [#allocation6], 0
    %14 = vsyncpa [#allocation4], 0
    %s15 = scalar_lea.sflag [#allocation4], 1
    %16 = vsyncpa %s15, 0
    loop: start=0, step=1, limit=6
    $region2: #{tpu_custom_call.1} parent=1 // loop_pre_header
      _
    $region3: #{tpu_custom_call.1} parent=1 // loop_header
      %s18 = sphi 0, %s22
      %p19 = scmp.ge.s32.totalorder %s18, 6
      %s28 = sphi 0, %s30
      %s31 = sphi 0, %s28
      %s32 = sphi 0, %s31
      %s48 = sphi 0, %s32
      %s52 = sphi 0, %s52
      %s54 = sphi 0, %s52
      %s55 = sphi 0, %s54
      %s69 = sphi 0, %s55
      %s73 = sphi 0, %s73
      %s75 = sphi 0, %s73
      %s76 = sphi 0, %s75
      %s90 = sphi 0, %s76
      %s94 = sphi 0, %s94
      %s96 = sphi 0, %s94
      %s97 = sphi 0, %s96
      %s111 = sphi 0, %s97
      %s115 = sphi 0, %s115
      %s117 = sphi 0, %s115
      %s118 = sphi 0, %s117
      %s132 = sphi 0, %s118
      %s138 = sphi 0, %s140
      %s141 = sphi 0, %s138
      %s142 = sphi 0, %s141
      %s158 = sphi 0, %s142
    $region4: #{tpu_custom_call.1} parent=1 // loop_header_branch
      %21 = sbr.rel (%p19) target = $region8
    $region5: #{tpu_custom_call.1} parent=1 // loop_body
      %s23 = ssub.s32 %s18, 1
      %s24 = ssub.s32 %s18, 2
      %s25 = sadd.s32 %s18, 1
      %s26 = ssub.s32 %s18, %s25
      %p27 = scmp.eq.s32.totalorder %s26, 0
      %s29 = sadd.s32 %s28, 1
      %s30 = scalar_select %p27, %s28, %s29
      %p33 = pneg %p27
      %p34 = scmp.eq.s32.totalorder %s18, 3
      %p35 = por %p33, %p34
      %p36 = scmp.ne.s32.totalorder %s28, %s31
      %p37 = scmp.eq.s32.totalorder %s18, 0
      %p38 = por %p36, %p37
      %p39 = scmp.ne.s32.totalorder %s28, %s31
      %p40 = scmp.eq.s32.totalorder %s23, 3
      %p41 = por %p39, %p40
      %p42 = scmp.ne.s32.totalorder %s31, %s32
      %p43 = scmp.eq.s32.totalorder %s23, 0
      %p44 = por %p42, %p43
      %p45 = scmp.ne.s32.totalorder %s31, %s32
      %p46 = scmp.eq.s32.totalorder %s24, 3
      %p47 = por %p45, %p46
      %p49 = scmp.ne.s32.totalorder %s32, %s48
      %p50 = scmp.eq.s32.totalorder %s24, 0
      %p51 = por %p49, %p50
      %s53 = sadd.s32 %s52, 1
      %p56 = scmp.eq.s32.totalorder %s18, 3
      %p57 = scmp.ne.s32.totalorder %s52, %s54
      %p58 = scmp.eq.s32.totalorder %s18, 0
      %p59 = por %p57, %p58
      %p60 = scmp.ne.s32.totalorder %s52, %s54
      %p61 = scmp.eq.s32.totalorder %s23, 3
      %p62 = por %p60, %p61
      %p63 = scmp.ne.s32.totalorder %s54, %s55
      %p64 = scmp.eq.s32.totalorder %s23, 0
      %p65 = por %p63, %p64
      %p66 = scmp.ne.s32.totalorder %s54, %s55
      %p67 = scmp.eq.s32.totalorder %s24, 3
      %p68 = por %p66, %p67
      %p70 = scmp.ne.s32.totalorder %s55, %s69
      %p71 = scmp.eq.s32.totalorder %s24, 0
      %p72 = por %p70, %p71
      %s74 = sadd.s32 %s73, 1
      %p77 = scmp.eq.s32.totalorder %s18, 3
      %p78 = scmp.ne.s32.totalorder %s73, %s75
      %p79 = scmp.eq.s32.totalorder %s18, 0
      %p80 = por %p78, %p79
      %p81 = scmp.ne.s32.totalorder %s73, %s75
      %p82 = scmp.eq.s32.totalorder %s23, 3
      %p83 = por %p81, %p82
      %p84 = scmp.ne.s32.totalorder %s75, %s76
      %p85 = scmp.eq.s32.totalorder %s23, 0
      %p86 = por %p84, %p85
      %p87 = scmp.ne.s32.totalorder %s75, %s76
      %p88 = scmp.eq.s32.totalorder %s24, 3
      %p89 = por %p87, %p88
      %p91 = scmp.ne.s32.totalorder %s76, %s90
      %p92 = scmp.eq.s32.totalorder %s24, 0
      %p93 = por %p91, %p92
      %s95 = sadd.s32 %s94, 1
      %p98 = scmp.eq.s32.totalorder %s18, 3
      %p99 = scmp.ne.s32.totalorder %s94, %s96
      %p100 = scmp.eq.s32.totalorder %s18, 0
      %p101 = por %p99, %p100
      %p102 = scmp.ne.s32.totalorder %s94, %s96
      %p103 = scmp.eq.s32.totalorder %s23, 3
      %p104 = por %p102, %p103
      %p105 = scmp.ne.s32.totalorder %s96, %s97
      %p106 = scmp.eq.s32.totalorder %s23, 0
      %p107 = por %p105, %p106
      %p108 = scmp.ne.s32.totalorder %s96, %s97
      %p109 = scmp.eq.s32.totalorder %s24, 3
      %p110 = por %p108, %p109
      %p112 = scmp.ne.s32.totalorder %s97, %s111
      %p113 = scmp.eq.s32.totalorder %s24, 0
      %p114 = por %p112, %p113
      %s116 = sadd.s32 %s115, 1
      %p119 = scmp.eq.s32.totalorder %s18, 3
      %p120 = scmp.ne.s32.totalorder %s115, %s117
      %p121 = scmp.eq.s32.totalorder %s18, 0
      %p122 = por %p120, %p121
      %p123 = scmp.ne.s32.totalorder %s115, %s117
      %p124 = scmp.eq.s32.totalorder %s23, 3
      %p125 = por %p123, %p124
      %p126 = scmp.ne.s32.totalorder %s117, %s118
      %p127 = scmp.eq.s32.totalorder %s23, 0
      %p128 = por %p126, %p127
      %p129 = scmp.ne.s32.totalorder %s117, %s118
      %p130 = scmp.eq.s32.totalorder %s24, 3
      %p131 = por %p129, %p130
      %p133 = scmp.ne.s32.totalorder %s118, %s132
      %p134 = scmp.eq.s32.totalorder %s24, 0
      %p135 = por %p133, %p134
      %s136 = ssub.s32 %s18, %s25
      %p137 = scmp.eq.s32.totalorder %s136, 0
      %s139 = sadd.s32 %s138, 1
      %s140 = scalar_select %p137, %s138, %s139
      %p143 = pneg %p137
      %p144 = scmp.eq.s32.totalorder %s18, 3
      %p145 = por %p143, %p144
      %p146 = scmp.ne.s32.totalorder %s138, %s141
      %p147 = scmp.eq.s32.totalorder %s18, 0
      %p148 = por %p146, %p147
      %p149 = scmp.ne.s32.totalorder %s138, %s141
      %p150 = scmp.eq.s32.totalorder %s23, 3
      %p151 = por %p149, %p150
      %p152 = scmp.ne.s32.totalorder %s141, %s142
      %p153 = scmp.eq.s32.totalorder %s23, 0
      %p154 = por %p152, %p153
      %p155 = scmp.ne.s32.totalorder %s141, %s142
      %p156 = scmp.eq.s32.totalorder %s24, 3
      %p157 = por %p155, %p156
      %p159 = scmp.ne.s32.totalorder %s142, %s158
      %p160 = scmp.eq.s32.totalorder %s24, 0
      %p161 = por %p159, %p160
      %p162 = scmp.le.s32.totalorder 1, %s18
      %p163 = scmp.lt.s32.totalorder %s18, 5
      %p164 = pnand %p162, %p163
      %p165 = pneg %p164
      // Predicated region
      $region9: #{tpu_custom_call.1} parent=5 // pred_check
        _
      $region10: #{tpu_custom_call.1} parent=5 // pred_check_branch
        %167 = sbr.rel (%p164) target = $region12
      $region11: #{tpu_custom_call.1} parent=5 // pred_region
        %s168 = ssub.s32 %s18, 1
        // Predicated region
        $region13: #{tpu_custom_call.1} parent=11 // pred_check
          %p169 = pneg %p65
        $region14: #{tpu_custom_call.1} parent=11 // pred_check_branch
          %171 = sbr.rel (%p169) target = $region16
        $region15: #{tpu_custom_call.1} parent=11 // pred_region
          %s173 = ssub.s32 512, 512
          %174 = vsyncadd [#allocation6], %s173
          %s175 = sshll.u32 [#allocation5], 4
          %s176 = int_to_ptr.vmem [resolvable:$true] %s175
          %181 = dma.hbm_to_vmem [thread:$0]  %s1, 512, %s176, [#allocation6], 64, 64, 4
        $region16: #{tpu_custom_call.1} parent=11 // pred_fallthru
          _
        // Predicated region
        $region17: #{tpu_custom_call.1} parent=11 // pred_check
          %p182 = pneg %p86
        $region18: #{tpu_custom_call.1} parent=11 // pred_check_branch
          %184 = sbr.rel (%p182) target = $region20
        $region19: #{tpu_custom_call.1} parent=11 // pred_region
          _
        $region20: #{tpu_custom_call.1} parent=11 // pred_fallthru
          _
        // Predicated region
        $region21: #{tpu_custom_call.1} parent=11 // pred_check
          %p185 = pneg %p107
        $region22: #{tpu_custom_call.1} parent=11 // pred_check_branch
          %187 = sbr.rel (%p185) target = $region24
        $region23: #{tpu_custom_call.1} parent=11 // pred_region
          %s189 = ssub.s32 2048, 2048
          %190 = vsyncadd [#allocation6], %s189
          %s191 = sshll.u32 [#allocation7], 4
          %s192 = int_to_ptr.vmem [resolvable:$true] %s191
          %197 = dma.hbm_to_vmem [thread:$0]  %s3, 2048, %s192, [#allocation6], 128, 128, 8
        $region24: #{tpu_custom_call.1} parent=11 // pred_fallthru
          _
        // Predicated region
        $region25: #{tpu_custom_call.1} parent=11 // pred_check
          %p198 = pneg %p128
        $region26: #{tpu_custom_call.1} parent=11 // pred_check_branch
          %200 = sbr.rel (%p198) target = $region28
        $region27: #{tpu_custom_call.1} parent=11 // pred_region
          _
        $region28: #{tpu_custom_call.1} parent=11 // pred_fallthru
          _
      $region12: #{tpu_custom_call.1} parent=5 // pred_fallthru
        _
      %p201 = scmp.lt.s32.totalorder %s18, 4
      // Predicated region
      $region29: #{tpu_custom_call.1} parent=5 // pred_check
        %p202 = pneg %p201
      $region30: #{tpu_custom_call.1} parent=5 // pred_check_branch
        %204 = sbr.rel (%p202) target = $region32
      $region31: #{tpu_custom_call.1} parent=5 // pred_region
        // Predicated region
        $region33: #{tpu_custom_call.1} parent=31 // pred_check
          %p205 = pneg %p38
        $region34: #{tpu_custom_call.1} parent=31 // pred_check_branch
          %207 = sbr.rel (%p205) target = $region36
        $region35: #{tpu_custom_call.1} parent=31 // pred_region
          %s208 = sand.u32 %s28, 1
          %s209 = scalar_lea.sflag [#allocation3], %s208
          %s210 = sand.u32 %s28, 1
          %s211 = smul.addr %s210, 128
          %s212 = scalar_lea.vmem [#allocation2], %s211
          %s213 = smul.u32 16, %s18
          %s215 = ssub.s32 2048, 2048
          %216 = vsyncadd %s209, %s215
          %s217 = smul.addr %s213, 2
          %s218 = smul.addr %s217, 64
          %s219 = scalar_lea.hbm %s0, %s218
          %s220 = sshll.u32 %s212, 4
          %s221 = int_to_ptr.vmem [resolvable:$true] %s220
          %226 = dma.hbm_to_vmem [thread:$0]  %s219, 2048, %s221, %s209, 64, 64, 4
        $region36: #{tpu_custom_call.1} parent=31 // pred_fallthru
          _
      $region32: #{tpu_custom_call.1} parent=5 // pred_fallthru
        _
      %p227 = scmp.le.s32.totalorder 1, %s18
      %p228 = scmp.lt.s32.totalorder %s18, 5
      %p229 = pnand %p227, %p228
      %p230 = pneg %p229
      // Predicated region
      $region37: #{tpu_custom_call.1} parent=5 // pred_check
        _
      $region38: #{tpu_custom_call.1} parent=5 // pred_check_branch
        %232 = sbr.rel (%p229) target = $region40
      $region39: #{tpu_custom_call.1} parent=5 // pred_region
        %s233 = ssub.s32 %s18, 1
        %s234 = sand.u32 %s31, 1
        %s235 = scalar_lea.sflag [#allocation3], %s234
        %s236 = sand.u32 %s31, 1
        %s237 = smul.addr %s236, 128
        %s238 = scalar_lea.vmem [#allocation2], %s237
        // Predicated region
        $region41: #{tpu_custom_call.1} parent=39 // pred_check
          %p239 = pneg %p44
        $region42: #{tpu_custom_call.1} parent=39 // pred_check_branch
          %241 = sbr.rel (%p239) target = $region44
        $region43: #{tpu_custom_call.1} parent=39 // pred_region
          %242 = dma.done %s235, 2048
        $region44: #{tpu_custom_call.1} parent=39 // pred_fallthru
          _
        // Predicated region
        $region45: #{tpu_custom_call.1} parent=39 // pred_check
          %p243 = pneg %p65
        $region46: #{tpu_custom_call.1} parent=39 // pred_check_branch
          %245 = sbr.rel (%p243) target = $region48
        $region47: #{tpu_custom_call.1} parent=39 // pred_region
          %246 = dma.done [#allocation6], 512
        $region48: #{tpu_custom_call.1} parent=39 // pred_fallthru
          _
        // Predicated region
        $region49: #{tpu_custom_call.1} parent=39 // pred_check
          %p247 = pneg %p107
        $region50: #{tpu_custom_call.1} parent=39 // pred_check_branch
          %249 = sbr.rel (%p247) target = $region52
        $region51: #{tpu_custom_call.1} parent=39 // pred_region
          %250 = dma.done [#allocation6], 2048
        $region52: #{tpu_custom_call.1} parent=39 // pred_fallthru
          _
        %s251 = sand.u32 %s31, 1
        %s252 = scalar_lea.sflag [#allocation3], %s251
        %s253 = sand.u32 %s31, 1
        %s254 = smul.addr %s253, 128
        %s255 = scalar_lea.vmem [#allocation2], %s254
        %p256 = pneg %p44
        %p257 = pneg %p41
        %p258 = pneg %p65
        %p259 = pneg %p62
        %p260 = pneg %p86
        %p261 = pneg %p83
        %p262 = pneg %p107
        %p263 = pneg %p104
        %p264 = pneg %p128
        %p265 = pneg %p125
        %p266 = pneg %p154
        %p267 = pneg %p151
        %s268 = sand.u32 %s141, 1
        %s269 = scalar_lea.sflag [#allocation4], %s268
        %s270 = sand.u32 %s141, 1
        %s271 = smul.addr %s270, 16
        %s272 = scalar_lea.vmem [#allocation8], %s271
        %s273 = smul.u32 16, %s23
        %s274 = smul.u32 2, %s23
        %v276 = vld [vmem:[%s238] sm:$0xf]
        %v277 = vld [vmem:[%s238 + $0x4] sm:$0xf]
        %v278 = vld [vmem:[%s238 + $0x8] sm:$0xf]
        %v279 = vld [vmem:[%s238 + $0xc] sm:$0xf]
        %v280 = vld [vmem:[%s238 + $0x10] sm:$0xf]
        %v281 = vld [vmem:[%s238 + $0x14] sm:$0xf]
        %v282 = vld [vmem:[%s238 + $0x18] sm:$0xf]
        %v283 = vld [vmem:[%s238 + $0x1c] sm:$0xf]
        %v284 = vld [vmem:[%s238 + $0x20] sm:$0xf]
        %v285 = vld [vmem:[%s238 + $0x24] sm:$0xf]
        %v286 = vld [vmem:[%s238 + $0x28] sm:$0xf]
        %v287 = vld [vmem:[%s238 + $0x2c] sm:$0xf]
        %v288 = vld [vmem:[%s238 + $0x30] sm:$0xf]
        %v289 = vld [vmem:[%s238 + $0x34] sm:$0xf]
        %v290 = vld [vmem:[%s238 + $0x38] sm:$0xf]
        %v291 = vld [vmem:[%s238 + $0x3c] sm:$0xf]
        %v292 = vld [vmem:[%s238 + $0x40] sm:$0xf]
        %v293 = vld [vmem:[%s238 + $0x44] sm:$0xf]
        %v294 = vld [vmem:[%s238 + $0x48] sm:$0xf]
        %v295 = vld [vmem:[%s238 + $0x4c] sm:$0xf]
        %v296 = vld [vmem:[%s238 + $0x50] sm:$0xf]
        %v297 = vld [vmem:[%s238 + $0x54] sm:$0xf]
        %v298 = vld [vmem:[%s238 + $0x58] sm:$0xf]
        %v299 = vld [vmem:[%s238 + $0x5c] sm:$0xf]
        %v300 = vld [vmem:[%s238 + $0x60] sm:$0xf]
        %v301 = vld [vmem:[%s238 + $0x64] sm:$0xf]
        %v302 = vld [vmem:[%s238 + $0x68] sm:$0xf]
        %v303 = vld [vmem:[%s238 + $0x6c] sm:$0xf]
        %v304 = vld [vmem:[%s238 + $0x70] sm:$0xf]
        %v305 = vld [vmem:[%s238 + $0x74] sm:$0xf]
        %v306 = vld [vmem:[%s238 + $0x78] sm:$0xf]
        %v307 = vld [vmem:[%s238 + $0x7c] sm:$0xf]
        %v308 = vld [vmem:[#allocation5] sm:$0xf]
        %v309 = vld [vmem:[#allocation5 + $0x4] sm:$0xf]
        %v310 = vld [vmem:[#allocation5 + $0x8] sm:$0xf]
        %v311 = vld [vmem:[#allocation5 + $0xc] sm:$0xf]
        %v312 = vld [vmem:[#allocation5 + $0x10] sm:$0xf]
        %v313 = vld [vmem:[#allocation5 + $0x14] sm:$0xf]
        %v314 = vld [vmem:[#allocation5 + $0x18] sm:$0xf]
        %v315 = vld [vmem:[#allocation5 + $0x1c] sm:$0xf]
        %v316 = vld [vmem:[%s2] sm:$0x1]
        %v318 = vlaneseq
        %v319 = vshrl.u32 %v318, 7
        %v320 = vsub.s32 0, %v319
        %v321 = vrot.slane %v316, %v320
        %v355 = vunpack.c.l.b16 %v276
        %v356 = vunpack.c.l.b16 %v277
        %v357 = vunpack.c.l.b16 %v278
        %v358 = vunpack.c.l.b16 %v279
        %v359 = vunpack.c.l.b16 %v280
        %v360 = vunpack.c.l.b16 %v281
        %v361 = vunpack.c.l.b16 %v282
        %v362 = vunpack.c.l.b16 %v283
        %v363 = vunpack.c.l.b16 %v284
        %v364 = vunpack.c.l.b16 %v285
        %v365 = vunpack.c.l.b16 %v286
        %v366 = vunpack.c.l.b16 %v287
        %v367 = vunpack.c.l.b16 %v288
        %v368 = vunpack.c.l.b16 %v289
        %v369 = vunpack.c.l.b16 %v290
        %v370 = vunpack.c.l.b16 %v291
        %v371 = vunpack.c.l.b16 %v292
        %v372 = vunpack.c.l.b16 %v293
        %v373 = vunpack.c.l.b16 %v294
        %v374 = vunpack.c.l.b16 %v295
        %v375 = vunpack.c.l.b16 %v296
        %v376 = vunpack.c.l.b16 %v297
        %v377 = vunpack.c.l.b16 %v298
        %v378 = vunpack.c.l.b16 %v299
        %v379 = vunpack.c.l.b16 %v300
        %v380 = vunpack.c.l.b16 %v301
        %v381 = vunpack.c.l.b16 %v302
        %v382 = vunpack.c.l.b16 %v303
        %v383 = vunpack.c.l.b16 %v304
        %v384 = vunpack.c.l.b16 %v305
        %v385 = vunpack.c.l.b16 %v306
        %v386 = vunpack.c.l.b16 %v307
        %v387 = vpack.c.b16 %v356, %v355
        %v388 = vpack.c.b16 %v358, %v357
        %v389 = vpack.c.b16 %v360, %v359
        %v390 = vpack.c.b16 %v362, %v361
        %v391 = vpack.c.b16 %v364, %v363
        %v392 = vpack.c.b16 %v366, %v365
        %v393 = vpack.c.b16 %v368, %v367
        %v394 = vpack.c.b16 %v370, %v369
        %v395 = vpack.c.b16 %v372, %v371
        %v396 = vpack.c.b16 %v374, %v373
        %v397 = vpack.c.b16 %v376, %v375
        %v398 = vpack.c.b16 %v378, %v377
        %v399 = vpack.c.b16 %v380, %v379
        %v400 = vpack.c.b16 %v382, %v381
        %v401 = vpack.c.b16 %v384, %v383
        %v402 = vpack.c.b16 %v386, %v385
        %v411 = vunpack.c.l.b16 %v308
        %v412 = vunpack.c.l.b16 %v309
        %v413 = vunpack.c.l.b16 %v310
        %v414 = vunpack.c.l.b16 %v311
        %v415 = vunpack.c.l.b16 %v312
        %v416 = vunpack.c.l.b16 %v313
        %v417 = vunpack.c.l.b16 %v314
        %v418 = vunpack.c.l.b16 %v315
        %v419 = vpack.c.b16 %v412, %v411
        %v420 = vpack.c.b16 %v414, %v413
        %v421 = vpack.c.b16 %v416, %v415
        %v422 = vpack.c.b16 %v418, %v417
        %vm427 = vcmask 523264
        %v429 = vsel %vm427, %v387, 0
        %v432 = vsel %vm427, %v388, 0
        %v435 = vsel %vm427, %v389, 0
        %v438 = vsel %vm427, %v390, 0
        %v441 = vsel %vm427, %v391, 0
        %v444 = vsel %vm427, %v392, 0
        %v447 = vsel %vm427, %v393, 0
        %v450 = vsel %vm427, %v394, 0
        %v453 = vsel %vm427, %v395, 0
        %v456 = vsel %vm427, %v396, 0
        %v459 = vsel %vm427, %v397, 0
        %v462 = vsel %vm427, %v398, 0
        %v465 = vsel %vm427, %v399, 0
        %v468 = vsel %vm427, %v400, 0
        %v471 = vsel %vm427, %v401, 0
        %v474 = vsel %vm427, %v402, 0
        %476 = vmatprep.subr.bf16.mxu0 0
        %477 = vmatpush1.bf16.msra.mxu0 %v419
        %478 = vmatprep.subr.bf16.mxu0 0
        %479 = vmatpush1.bf16.msra.mxu0 %v420
        %480 = vmatprep.subr.bf16.mxu0 0
        %481 = vmatpush1.bf16.msra.mxu0 %v421
        %482 = vmatprep.subr.bf16.mxu0 0
        %483 = vmatpush1.bf16.msra.mxu0 %v422
        %484 = vmatprep.subr.bf16.mxu0 0
        %485 = vmatpush1.bf16.msra.mxu0 0
        %486 = vmatprep.subr.bf16.mxu0 0
        %487 = vmatpush1.bf16.msra.mxu0 0
        %488 = vmatprep.subr.bf16.mxu0 0
        %489 = vmatpush1.bf16.msra.mxu0 0
        %490 = vmatprep.subr.bf16.mxu0 0
        %491 = vmatpush1.bf16.msra.mxu0 0
        %492 = vmatprep.subr.bf16.mxu0 0
        %493 = vmatpush1.bf16.msra.mxu0 0
        %494 = vmatprep.subr.bf16.mxu0 0
        %495 = vmatpush1.bf16.msra.mxu0 0
        %496 = vmatprep.subr.bf16.mxu0 0
        %497 = vmatpush1.bf16.msra.mxu0 0
        %498 = vmatprep.subr.bf16.mxu0 0
        %499 = vmatpush1.bf16.msra.mxu0 0
        %500 = vmatprep.subr.bf16.mxu0 0
        %501 = vmatpush1.bf16.msra.mxu0 0
        %502 = vmatprep.subr.bf16.mxu0 0
        %503 = vmatpush1.bf16.msra.mxu0 0
        %504 = vmatprep.subr.bf16.mxu0 0
        %505 = vmatpush1.bf16.msra.mxu0 0
        %506 = vmatprep.subr.bf16.mxu0 0
        %507 = vmatpush1.bf16.msra.mxu0 0
        %508 = vmatprep.mubr.bf16.mxu0 0
        %509 = vmatmul.mubr.bf16.gmra.mrb[0].mxu0 %v429
        %v510 = vpop.f32.mrb[0].mxu0
        %v511 = vadd.f32 %v321, %v510
        %v512 = vpop.f32.mrb[0].mxu0
        %v513 = vpop.f32.mrb[0].mxu0
        %v514 = vadd.f32 %v321, %v513
        %v515 = vpop.f32.mrb[0].mxu0
        %516 = vmatprep.mubr.bf16.mxu0 0
        %517 = vmatmul.mubr.bf16.gmra.mrb[0].mxu0 %v432
        %v518 = vpop.f32.mrb[0].mxu0
        %v519 = vadd.f32 %v321, %v518
        %v520 = vpop.f32.mrb[0].mxu0
        %v521 = vpop.f32.mrb[0].mxu0
        %v522 = vadd.f32 %v321, %v521
        %v523 = vpop.f32.mrb[0].mxu0
        %524 = vmatprep.mubr.bf16.mxu0 0
        %525 = vmatmul.mubr.bf16.gmra.mrb[0].mxu0 %v435
        %v526 = vpop.f32.mrb[0].mxu0
        %v527 = vadd.f32 %v321, %v526
        %v528 = vpop.f32.mrb[0].mxu0
        %v529 = vpop.f32.mrb[0].mxu0
        %v530 = vadd.f32 %v321, %v529
        %v531 = vpop.f32.mrb[0].mxu0
        %532 = vmatprep.mubr.bf16.mxu0 0
        %533 = vmatmul.mubr.bf16.gmra.mrb[0].mxu0 %v438
        %v534 = vpop.f32.mrb[0].mxu0
        %v535 = vadd.f32 %v321, %v534
        %v536 = vpop.f32.mrb[0].mxu0
        %v537 = vpop.f32.mrb[0].mxu0
        %v538 = vadd.f32 %v321, %v537
        %v539 = vpop.f32.mrb[0].mxu0
        %540 = vmatprep.mubr.bf16.mxu0 0
        %541 = vmatmul.mubr.bf16.gmra.mrb[0].mxu0 %v441
        %v542 = vpop.f32.mrb[0].mxu0
        %v543 = vadd.f32 %v321, %v542
        %v544 = vpop.f32.mrb[0].mxu0
        %v545 = vpop.f32.mrb[0].mxu0
        %v546 = vadd.f32 %v321, %v545
        %v547 = vpop.f32.mrb[0].mxu0
        %548 = vmatprep.mubr.bf16.mxu0 0
        %549 = vmatmul.mubr.bf16.gmra.mrb[0].mxu0 %v444
        %v550 = vpop.f32.mrb[0].mxu0
        %v551 = vadd.f32 %v321, %v550
        %v552 = vpop.f32.mrb[0].mxu0
        %v553 = vpop.f32.mrb[0].mxu0
        %v554 = vadd.f32 %v321, %v553
        %v555 = vpop.f32.mrb[0].mxu0
        %556 = vmatprep.mubr.bf16.mxu0 0
        %557 = vmatmul.mubr.bf16.gmra.mrb[0].mxu0 %v447
        %v558 = vpop.f32.mrb[0].mxu0
        %v559 = vadd.f32 %v321, %v558
        %v560 = vpop.f32.mrb[0].mxu0
        %v561 = vpop.f32.mrb[0].mxu0
        %v562 = vadd.f32 %v321, %v561
        %v563 = vpop.f32.mrb[0].mxu0
        %564 = vmatprep.mubr.bf16.mxu0 0
        %565 = vmatmul.mubr.bf16.gmra.mrb[0].mxu0 %v450
        %v566 = vpop.f32.mrb[0].mxu0
        %v567 = vadd.f32 %v321, %v566
        %v568 = vpop.f32.mrb[0].mxu0
        %v569 = vpop.f32.mrb[0].mxu0
        %v570 = vadd.f32 %v321, %v569
        %v571 = vpop.f32.mrb[0].mxu0
        %572 = vmatprep.mubr.bf16.mxu0 0
        %573 = vmatmul.mubr.bf16.gmra.mrb[0].mxu0 %v453
        %v574 = vpop.f32.mrb[0].mxu0
        %v575 = vadd.f32 %v321, %v574
        %v576 = vpop.f32.mrb[0].mxu0
        %v577 = vpop.f32.mrb[0].mxu0
        %v578 = vadd.f32 %v321, %v577
        %v579 = vpop.f32.mrb[0].mxu0
        %580 = vmatprep.mubr.bf16.mxu0 0
        %581 = vmatmul.mubr.bf16.gmra.mrb[0].mxu0 %v456
        %v582 = vpop.f32.mrb[0].mxu0
        %v583 = vadd.f32 %v321, %v582
        %v584 = vpop.f32.mrb[0].mxu0
        %v585 = vpop.f32.mrb[0].mxu0
        %v586 = vadd.f32 %v321, %v585
        %v587 = vpop.f32.mrb[0].mxu0
        %588 = vmatprep.mubr.bf16.mxu0 0
        %589 = vmatmul.mubr.bf16.gmra.mrb[0].mxu0 %v459
        %v590 = vpop.f32.mrb[0].mxu0
        %v591 = vadd.f32 %v321, %v590
        %v592 = vpop.f32.mrb[0].mxu0
        %v593 = vpop.f32.mrb[0].mxu0
        %v594 = vadd.f32 %v321, %v593
        %v595 = vpop.f32.mrb[0].mxu0
        %596 = vmatprep.mubr.bf16.mxu0 0
        %597 = vmatmul.mubr.bf16.gmra.mrb[0].mxu0 %v462
        %v598 = vpop.f32.mrb[0].mxu0
        %v599 = vadd.f32 %v321, %v598
        %v600 = vpop.f32.mrb[0].mxu0
        %v601 = vpop.f32.mrb[0].mxu0
        %v602 = vadd.f32 %v321, %v601
        %v603 = vpop.f32.mrb[0].mxu0
        %604 = vmatprep.mubr.bf16.mxu0 0
        %605 = vmatmul.mubr.bf16.gmra.mrb[0].mxu0 %v465
        %v606 = vpop.f32.mrb[0].mxu0
        %v607 = vadd.f32 %v321, %v606
        %v608 = vpop.f32.mrb[0].mxu0
        %v609 = vpop.f32.mrb[0].mxu0
        %v610 = vadd.f32 %v321, %v609
        %v611 = vpop.f32.mrb[0].mxu0
        %612 = vmatprep.mubr.bf16.mxu0 0
        %613 = vmatmul.mubr.bf16.gmra.mrb[0].mxu0 %v468
        %v614 = vpop.f32.mrb[0].mxu0
        %v615 = vadd.f32 %v321, %v614
        %v616 = vpop.f32.mrb[0].mxu0
        %v617 = vpop.f32.mrb[0].mxu0
        %v618 = vadd.f32 %v321, %v617
        %v619 = vpop.f32.mrb[0].mxu0
        %620 = vmatprep.mubr.bf16.mxu0 0
        %621 = vmatmul.mubr.bf16.gmra.mrb[0].mxu0 %v471
        %v622 = vpop.f32.mrb[0].mxu0
        %v623 = vadd.f32 %v321, %v622
        %v624 = vpop.f32.mrb[0].mxu0
        %v625 = vpop.f32.mrb[0].mxu0
        %v626 = vadd.f32 %v321, %v625
        %v627 = vpop.f32.mrb[0].mxu0
        %628 = vmatprep.mubr.bf16.mxu0 0
        %629 = vmatmul.mubr.bf16.gmra.mrb[0].mxu0 %v474
        %v630 = vpop.f32.mrb[0].mxu0
        %v631 = vadd.f32 %v321, %v630
        %v632 = vpop.f32.mrb[0].mxu0
        %v633 = vpop.f32.mrb[0].mxu0
        %v634 = vadd.f32 %v321, %v633
        %v635 = vpop.f32.mrb[0].mxu0
        %636 = vdwg.mxu0
        %637 = vadd.xlane.f32.xlu0 %v511
        %v638 = vpop.xlane.xlu0 %637
        %639 = vadd.xlane.f32.xlu0 %v514
        %v640 = vpop.xlane.xlu0 %639
        %641 = vadd.xlane.f32.xlu0 %v519
        %v642 = vpop.xlane.xlu0 %641
        %643 = vadd.xlane.f32.xlu0 %v522
        %v644 = vpop.xlane.xlu0 %643
        %645 = vadd.xlane.f32.xlu0 %v527
        %v646 = vpop.xlane.xlu0 %645
        %647 = vadd.xlane.f32.xlu0 %v530
        %v648 = vpop.xlane.xlu0 %647
        %649 = vadd.xlane.f32.xlu0 %v535
        %v650 = vpop.xlane.xlu0 %649
        %651 = vadd.xlane.f32.xlu0 %v538
        %v652 = vpop.xlane.xlu0 %651
        %653 = vadd.xlane.f32.xlu0 %v543
        %v654 = vpop.xlane.xlu0 %653
        %655 = vadd.xlane.f32.xlu0 %v546
        %v656 = vpop.xlane.xlu0 %655
        %657 = vadd.xlane.f32.xlu0 %v551
        %v658 = vpop.xlane.xlu0 %657
        %659 = vadd.xlane.f32.xlu0 %v554
        %v660 = vpop.xlane.xlu0 %659
        %661 = vadd.xlane.f32.xlu0 %v559
        %v662 = vpop.xlane.xlu0 %661
        %663 = vadd.xlane.f32.xlu0 %v562
        %v664 = vpop.xlane.xlu0 %663
        %665 = vadd.xlane.f32.xlu0 %v567
        %v666 = vpop.xlane.xlu0 %665
        %667 = vadd.xlane.f32.xlu0 %v570
        %v668 = vpop.xlane.xlu0 %667
        %669 = vadd.xlane.f32.xlu0 %v575
        %v670 = vpop.xlane.xlu0 %669
        %671 = vadd.xlane.f32.xlu0 %v578
        %v672 = vpop.xlane.xlu0 %671
        %673 = vadd.xlane.f32.xlu0 %v583
        %v674 = vpop.xlane.xlu0 %673
        %675 = vadd.xlane.f32.xlu0 %v586
        %v676 = vpop.xlane.xlu0 %675
        %677 = vadd.xlane.f32.xlu0 %v591
        %v678 = vpop.xlane.xlu0 %677
        %679 = vadd.xlane.f32.xlu0 %v594
        %v680 = vpop.xlane.xlu0 %679
        %681 = vadd.xlane.f32.xlu0 %v599
        %v682 = vpop.xlane.xlu0 %681
        %683 = vadd.xlane.f32.xlu0 %v602
        %v684 = vpop.xlane.xlu0 %683
        %685 = vadd.xlane.f32.xlu0 %v607
        %v686 = vpop.xlane.xlu0 %685
        %687 = vadd.xlane.f32.xlu0 %v610
        %v688 = vpop.xlane.xlu0 %687
        %689 = vadd.xlane.f32.xlu0 %v615
        %v690 = vpop.xlane.xlu0 %689
        %691 = vadd.xlane.f32.xlu0 %v618
        %v692 = vpop.xlane.xlu0 %691
        %693 = vadd.xlane.f32.xlu0 %v623
        %v694 = vpop.xlane.xlu0 %693
        %695 = vadd.xlane.f32.xlu0 %v626
        %v696 = vpop.xlane.xlu0 %695
        %697 = vadd.xlane.f32.xlu0 %v631
        %v698 = vpop.xlane.xlu0 %697
        %699 = vadd.xlane.f32.xlu0 %v634
        %v700 = vpop.xlane.xlu0 %699
        %v701 = vrcp.pop 128.0
        %v702 = vmul.f32 %v638, %v701
        %v703 = vmul.f32 %v640, %v701
        %v704 = vmul.f32 %v642, %v701
        %v705 = vmul.f32 %v644, %v701
        %v706 = vmul.f32 %v646, %v701
        %v707 = vmul.f32 %v648, %v701
        %v708 = vmul.f32 %v650, %v701
        %v709 = vmul.f32 %v652, %v701
        %v710 = vmul.f32 %v654, %v701
        %v711 = vmul.f32 %v656, %v701
        %v712 = vmul.f32 %v658, %v701
        %v713 = vmul.f32 %v660, %v701
        %v714 = vmul.f32 %v662, %v701
        %v715 = vmul.f32 %v664, %v701
        %v716 = vmul.f32 %v666, %v701
        %v717 = vmul.f32 %v668, %v701
        %v718 = vmul.f32 %v670, %v701
        %v719 = vmul.f32 %v672, %v701
        %v720 = vmul.f32 %v674, %v701
        %v721 = vmul.f32 %v676, %v701
        %v722 = vmul.f32 %v678, %v701
        %v723 = vmul.f32 %v680, %v701
        %v724 = vmul.f32 %v682, %v701
        %v725 = vmul.f32 %v684, %v701
        %v726 = vmul.f32 %v686, %v701
        %v727 = vmul.f32 %v688, %v701
        %v728 = vmul.f32 %v690, %v701
        %v729 = vmul.f32 %v692, %v701
        %v730 = vmul.f32 %v694, %v701
        %v731 = vmul.f32 %v696, %v701
        %v732 = vmul.f32 %v698, %v701
        %v733 = vmul.f32 %v700, %v701
        %v734 = vsub.f32 %v511, %v702
        %v735 = vsub.f32 %v514, %v703
        %v736 = vsub.f32 %v519, %v704
        %v737 = vsub.f32 %v522, %v705
        %v738 = vsub.f32 %v527, %v706
        %v739 = vsub.f32 %v530, %v707
        %v740 = vsub.f32 %v535, %v708
        %v741 = vsub.f32 %v538, %v709
        %v742 = vsub.f32 %v543, %v710
        %v743 = vsub.f32 %v546, %v711
        %v744 = vsub.f32 %v551, %v712
        %v745 = vsub.f32 %v554, %v713
        %v746 = vsub.f32 %v559, %v714
        %v747 = vsub.f32 %v562, %v715
        %v748 = vsub.f32 %v567, %v716
        %v749 = vsub.f32 %v570, %v717
        %v750 = vsub.f32 %v575, %v718
        %v751 = vsub.f32 %v578, %v719
        %v752 = vsub.f32 %v583, %v720
        %v753 = vsub.f32 %v586, %v721
        %v754 = vsub.f32 %v591, %v722
        %v755 = vsub.f32 %v594, %v723
        %v756 = vsub.f32 %v599, %v724
        %v757 = vsub.f32 %v602, %v725
        %v758 = vsub.f32 %v607, %v726
        %v759 = vsub.f32 %v610, %v727
        %v760 = vsub.f32 %v615, %v728
        %v761 = vsub.f32 %v618, %v729
        %v762 = vsub.f32 %v623, %v730
        %v763 = vsub.f32 %v626, %v731
        %v764 = vsub.f32 %v631, %v732
        %v765 = vsub.f32 %v634, %v733
        %v766 = vmul.f32 %v734, %v734
        %v767 = vmul.f32 %v735, %v735
        %v768 = vmul.f32 %v736, %v736
        %v769 = vmul.f32 %v737, %v737
        %v770 = vmul.f32 %v738, %v738
        %v771 = vmul.f32 %v739, %v739
        %v772 = vmul.f32 %v740, %v740
        %v773 = vmul.f32 %v741, %v741
        %v774 = vmul.f32 %v742, %v742
        %v775 = vmul.f32 %v743, %v743
        %v776 = vmul.f32 %v744, %v744
        %v777 = vmul.f32 %v745, %v745
        %v778 = vmul.f32 %v746, %v746
        %v779 = vmul.f32 %v747, %v747
        %v780 = vmul.f32 %v748, %v748
        %v781 = vmul.f32 %v749, %v749
        %v782 = vmul.f32 %v750, %v750
        %v783 = vmul.f32 %v751, %v751
        %v784 = vmul.f32 %v752, %v752
        %v785 = vmul.f32 %v753, %v753
        %v786 = vmul.f32 %v754, %v754
        %v787 = vmul.f32 %v755, %v755
        %v788 = vmul.f32 %v756, %v756
        %v789 = vmul.f32 %v757, %v757
        %v790 = vmul.f32 %v758, %v758
        %v791 = vmul.f32 %v759, %v759
        %v792 = vmul.f32 %v760, %v760
        %v793 = vmul.f32 %v761, %v761
        %v794 = vmul.f32 %v762, %v762
        %v795 = vmul.f32 %v763, %v763
        %v796 = vmul.f32 %v764, %v764
        %v797 = vmul.f32 %v765, %v765
        %798 = vadd.xlane.f32.xlu0 %v766
        %v799 = vpop.xlane.xlu0 %798
        %800 = vadd.xlane.f32.xlu0 %v767
        %v801 = vpop.xlane.xlu0 %800
        %802 = vadd.xlane.f32.xlu0 %v768
        %v803 = vpop.xlane.xlu0 %802
        %804 = vadd.xlane.f32.xlu0 %v769
        %v805 = vpop.xlane.xlu0 %804
        %806 = vadd.xlane.f32.xlu0 %v770
        %v807 = vpop.xlane.xlu0 %806
        %808 = vadd.xlane.f32.xlu0 %v771
        %v809 = vpop.xlane.xlu0 %808
        %810 = vadd.xlane.f32.xlu0 %v772
        %v811 = vpop.xlane.xlu0 %810
        %812 = vadd.xlane.f32.xlu0 %v773
        %v813 = vpop.xlane.xlu0 %812
        %814 = vadd.xlane.f32.xlu0 %v774
        %v815 = vpop.xlane.xlu0 %814
        %816 = vadd.xlane.f32.xlu0 %v775
        %v817 = vpop.xlane.xlu0 %816
        %818 = vadd.xlane.f32.xlu0 %v776
        %v819 = vpop.xlane.xlu0 %818
        %820 = vadd.xlane.f32.xlu0 %v777
        %v821 = vpop.xlane.xlu0 %820
        %822 = vadd.xlane.f32.xlu0 %v778
        %v823 = vpop.xlane.xlu0 %822
        %824 = vadd.xlane.f32.xlu0 %v779
        %v825 = vpop.xlane.xlu0 %824
        %826 = vadd.xlane.f32.xlu0 %v780
        %v827 = vpop.xlane.xlu0 %826
        %828 = vadd.xlane.f32.xlu0 %v781
        %v829 = vpop.xlane.xlu0 %828
        %830 = vadd.xlane.f32.xlu0 %v782
        %v831 = vpop.xlane.xlu0 %830
        %832 = vadd.xlane.f32.xlu0 %v783
        %v833 = vpop.xlane.xlu0 %832
        %834 = vadd.xlane.f32.xlu0 %v784
        %v835 = vpop.xlane.xlu0 %834
        %836 = vadd.xlane.f32.xlu0 %v785
        %v837 = vpop.xlane.xlu0 %836
        %838 = vadd.xlane.f32.xlu0 %v786
        %v839 = vpop.xlane.xlu0 %838
        %840 = vadd.xlane.f32.xlu0 %v787
        %v841 = vpop.xlane.xlu0 %840
        %842 = vadd.xlane.f32.xlu0 %v788
        %v843 = vpop.xlane.xlu0 %842
        %844 = vadd.xlane.f32.xlu0 %v789
        %v845 = vpop.xlane.xlu0 %844
        %846 = vadd.xlane.f32.xlu0 %v790
        %v847 = vpop.xlane.xlu0 %846
        %848 = vadd.xlane.f32.xlu0 %v791
        %v849 = vpop.xlane.xlu0 %848
        %850 = vadd.xlane.f32.xlu0 %v792
        %v851 = vpop.xlane.xlu0 %850
        %852 = vadd.xlane.f32.xlu0 %v793
        %v853 = vpop.xlane.xlu0 %852
        %854 = vadd.xlane.f32.xlu0 %v794
        %v855 = vpop.xlane.xlu0 %854
        %856 = vadd.xlane.f32.xlu0 %v795
        %v857 = vpop.xlane.xlu0 %856
        %858 = vadd.xlane.f32.xlu0 %v796
        %v859 = vpop.xlane.xlu0 %858
        %860 = vadd.xlane.f32.xlu0 %v797
        %v861 = vpop.xlane.xlu0 %860
        %v862 = vmul.f32 %v799, %v701
        %v863 = vmul.f32 %v801, %v701
        %v864 = vmul.f32 %v803, %v701
        %v865 = vmul.f32 %v805, %v701
        %v866 = vmul.f32 %v807, %v701
        %v867 = vmul.f32 %v809, %v701
        %v868 = vmul.f32 %v811, %v701
        %v869 = vmul.f32 %v813, %v701
        %v870 = vmul.f32 %v815, %v701
        %v871 = vmul.f32 %v817, %v701
        %v872 = vmul.f32 %v819, %v701
        %v873 = vmul.f32 %v821, %v701
        %v874 = vmul.f32 %v823, %v701
        %v875 = vmul.f32 %v825, %v701
        %v876 = vmul.f32 %v827, %v701
        %v877 = vmul.f32 %v829, %v701
        %v878 = vmul.f32 %v831, %v701
        %v879 = vmul.f32 %v833, %v701
        %v880 = vmul.f32 %v835, %v701
        %v881 = vmul.f32 %v837, %v701
        %v882 = vmul.f32 %v839, %v701
        %v883 = vmul.f32 %v841, %v701
        %v884 = vmul.f32 %v843, %v701
        %v885 = vmul.f32 %v845, %v701
        %v886 = vmul.f32 %v847, %v701
        %v887 = vmul.f32 %v849, %v701
        %v888 = vmul.f32 %v851, %v701
        %v889 = vmul.f32 %v853, %v701
        %v890 = vmul.f32 %v855, %v701
        %v891 = vmul.f32 %v857, %v701
        %v892 = vmul.f32 %v859, %v701
        %v893 = vmul.f32 %v861, %v701
        %v894 = vadd.f32 %v862, 1e-06
        %v895 = vadd.f32 %v863, 1e-06
        %v896 = vadd.f32 %v864, 1e-06
        %v897 = vadd.f32 %v865, 1e-06
        %v898 = vadd.f32 %v866, 1e-06
        %v899 = vadd.f32 %v867, 1e-06
        %v900 = vadd.f32 %v868, 1e-06
        %v901 = vadd.f32 %v869, 1e-06
        %v902 = vadd.f32 %v870, 1e-06
        %v903 = vadd.f32 %v871, 1e-06
        %v904 = vadd.f32 %v872, 1e-06
        %v905 = vadd.f32 %v873, 1e-06
        %v906 = vadd.f32 %v874, 1e-06
        %v907 = vadd.f32 %v875, 1e-06
        %v908 = vadd.f32 %v876, 1e-06
        %v909 = vadd.f32 %v877, 1e-06
        %v910 = vadd.f32 %v878, 1e-06
        %v911 = vadd.f32 %v879, 1e-06
        %v912 = vadd.f32 %v880, 1e-06
        %v913 = vadd.f32 %v881, 1e-06
        %v914 = vadd.f32 %v882, 1e-06
        %v915 = vadd.f32 %v883, 1e-06
        %v916 = vadd.f32 %v884, 1e-06
        %v917 = vadd.f32 %v885, 1e-06
        %v918 = vadd.f32 %v886, 1e-06
        %v919 = vadd.f32 %v887, 1e-06
        %v920 = vadd.f32 %v888, 1e-06
        %v921 = vadd.f32 %v889, 1e-06
        %v922 = vadd.f32 %v890, 1e-06
        %v923 = vadd.f32 %v891, 1e-06
        %v924 = vadd.f32 %v892, 1e-06
        %v925 = vadd.f32 %v893, 1e-06
        %v926 = vrsqrt.pop %v894
        %v927 = vrsqrt.pop %v895
        %v928 = vrsqrt.pop %v896
        %v929 = vrsqrt.pop %v897
        %v930 = vrsqrt.pop %v898
        %v931 = vrsqrt.pop %v899
        %v932 = vrsqrt.pop %v900
        %v933 = vrsqrt.pop %v901
        %v934 = vrsqrt.pop %v902
        %v935 = vrsqrt.pop %v903
        %v936 = vrsqrt.pop %v904
        %v937 = vrsqrt.pop %v905
        %v938 = vrsqrt.pop %v906
        %v939 = vrsqrt.pop %v907
        %v940 = vrsqrt.pop %v908
        %v941 = vrsqrt.pop %v909
        %v942 = vrsqrt.pop %v910
        %v943 = vrsqrt.pop %v911
        %v944 = vrsqrt.pop %v912
        %v945 = vrsqrt.pop %v913
        %v946 = vrsqrt.pop %v914
        %v947 = vrsqrt.pop %v915
        %v948 = vrsqrt.pop %v916
        %v949 = vrsqrt.pop %v917
        %v950 = vrsqrt.pop %v918
        %v951 = vrsqrt.pop %v919
        %v952 = vrsqrt.pop %v920
        %v953 = vrsqrt.pop %v921
        %v954 = vrsqrt.pop %v922
        %v955 = vrsqrt.pop %v923
        %v956 = vrsqrt.pop %v924
        %v957 = vrsqrt.pop %v925
        %v958 = vmul.f32 %v734, %v926
        %v959 = vmul.f32 %v735, %v927
        %v960 = vmul.f32 %v736, %v928
        %v961 = vmul.f32 %v737, %v929
        %v962 = vmul.f32 %v738, %v930
        %v963 = vmul.f32 %v739, %v931
        %v964 = vmul.f32 %v740, %v932
        %v965 = vmul.f32 %v741, %v933
        %v966 = vmul.f32 %v742, %v934
        %v967 = vmul.f32 %v743, %v935
        %v968 = vmul.f32 %v744, %v936
        %v969 = vmul.f32 %v745, %v937
        %v970 = vmul.f32 %v746, %v938
        %v971 = vmul.f32 %v747, %v939
        %v972 = vmul.f32 %v748, %v940
        %v973 = vmul.f32 %v749, %v941
        %v974 = vmul.f32 %v750, %v942
        %v975 = vmul.f32 %v751, %v943
        %v976 = vmul.f32 %v752, %v944
        %v977 = vmul.f32 %v753, %v945
        %v978 = vmul.f32 %v754, %v946
        %v979 = vmul.f32 %v755, %v947
        %v980 = vmul.f32 %v756, %v948
        %v981 = vmul.f32 %v757, %v949
        %v982 = vmul.f32 %v758, %v950
        %v983 = vmul.f32 %v759, %v951
        %v984 = vmul.f32 %v760, %v952
        %v985 = vmul.f32 %v761, %v953
        %v986 = vmul.f32 %v762, %v954
        %v987 = vmul.f32 %v763, %v955
        %v988 = vmul.f32 %v764, %v956
        %v989 = vmul.f32 %v765, %v957
        %v990 = vadd.f32 %v958, %v959
        %v991 = vrot.slane %v990, 4
        %v992 = vadd.f32 %v990, %v991
        %v993 = vrot.slane %v992, 2
        %v994 = vadd.f32 %v992, %v993
        %v995 = vrot.slane %v994, 1
        %v996 = vadd.f32 %v994, %v995
        %v997 = vadd.f32 %v960, %v961
        %v998 = vrot.slane %v997, 4
        %v999 = vadd.f32 %v997, %v998
        %v1000 = vrot.slane %v999, 2
        %v1001 = vadd.f32 %v999, %v1000
        %v1002 = vrot.slane %v1001, 1
        %v1003 = vadd.f32 %v1001, %v1002
        %v1004 = vadd.f32 %v962, %v963
        %v1005 = vrot.slane %v1004, 4
        %v1006 = vadd.f32 %v1004, %v1005
        %v1007 = vrot.slane %v1006, 2
        %v1008 = vadd.f32 %v1006, %v1007
        %v1009 = vrot.slane %v1008, 1
        %v1010 = vadd.f32 %v1008, %v1009
        %v1011 = vadd.f32 %v964, %v965
        %v1012 = vrot.slane %v1011, 4
        %v1013 = vadd.f32 %v1011, %v1012
        %v1014 = vrot.slane %v1013, 2
        %v1015 = vadd.f32 %v1013, %v1014
        %v1016 = vrot.slane %v1015, 1
        %v1017 = vadd.f32 %v1015, %v1016
        %v1018 = vadd.f32 %v966, %v967
        %v1019 = vrot.slane %v1018, 4
        %v1020 = vadd.f32 %v1018, %v1019
        %v1021 = vrot.slane %v1020, 2
        %v1022 = vadd.f32 %v1020, %v1021
        %v1023 = vrot.slane %v1022, 1
        %v1024 = vadd.f32 %v1022, %v1023
        %v1025 = vadd.f32 %v968, %v969
        %v1026 = vrot.slane %v1025, 4
        %v1027 = vadd.f32 %v1025, %v1026
        %v1028 = vrot.slane %v1027, 2
        %v1029 = vadd.f32 %v1027, %v1028
        %v1030 = vrot.slane %v1029, 1
        %v1031 = vadd.f32 %v1029, %v1030
        %v1032 = vadd.f32 %v970, %v971
        %v1033 = vrot.slane %v1032, 4
        %v1034 = vadd.f32 %v1032, %v1033
        %v1035 = vrot.slane %v1034, 2
        %v1036 = vadd.f32 %v1034, %v1035
        %v1037 = vrot.slane %v1036, 1
        %v1038 = vadd.f32 %v1036, %v1037
        %v1039 = vadd.f32 %v972, %v973
        %v1040 = vrot.slane %v1039, 4
        %v1041 = vadd.f32 %v1039, %v1040
        %v1042 = vrot.slane %v1041, 2
        %v1043 = vadd.f32 %v1041, %v1042
        %v1044 = vrot.slane %v1043, 1
        %v1045 = vadd.f32 %v1043, %v1044
        %v1046 = vadd.f32 %v974, %v975
        %v1047 = vrot.slane %v1046, 4
        %v1048 = vadd.f32 %v1046, %v1047
        %v1049 = vrot.slane %v1048, 2
        %v1050 = vadd.f32 %v1048, %v1049
        %v1051 = vrot.slane %v1050, 1
        %v1052 = vadd.f32 %v1050, %v1051
        %v1053 = vadd.f32 %v976, %v977
        %v1054 = vrot.slane %v1053, 4
        %v1055 = vadd.f32 %v1053, %v1054
        %v1056 = vrot.slane %v1055, 2
        %v1057 = vadd.f32 %v1055, %v1056
        %v1058 = vrot.slane %v1057, 1
        %v1059 = vadd.f32 %v1057, %v1058
        %v1060 = vadd.f32 %v978, %v979
        %v1061 = vrot.slane %v1060, 4
        %v1062 = vadd.f32 %v1060, %v1061
        %v1063 = vrot.slane %v1062, 2
        %v1064 = vadd.f32 %v1062, %v1063
        %v1065 = vrot.slane %v1064, 1
        %v1066 = vadd.f32 %v1064, %v1065
        %v1067 = vadd.f32 %v980, %v981
        %v1068 = vrot.slane %v1067, 4
        %v1069 = vadd.f32 %v1067, %v1068
        %v1070 = vrot.slane %v1069, 2
        %v1071 = vadd.f32 %v1069, %v1070
        %v1072 = vrot.slane %v1071, 1
        %v1073 = vadd.f32 %v1071, %v1072
        %v1074 = vadd.f32 %v982, %v983
        %v1075 = vrot.slane %v1074, 4
        %v1076 = vadd.f32 %v1074, %v1075
        %v1077 = vrot.slane %v1076, 2
        %v1078 = vadd.f32 %v1076, %v1077
        %v1079 = vrot.slane %v1078, 1
        %v1080 = vadd.f32 %v1078, %v1079
        %v1081 = vadd.f32 %v984, %v985
        %v1082 = vrot.slane %v1081, 4
        %v1083 = vadd.f32 %v1081, %v1082
        %v1084 = vrot.slane %v1083, 2
        %v1085 = vadd.f32 %v1083, %v1084
        %v1086 = vrot.slane %v1085, 1
        %v1087 = vadd.f32 %v1085, %v1086
        %v1088 = vadd.f32 %v986, %v987
        %v1089 = vrot.slane %v1088, 4
        %v1090 = vadd.f32 %v1088, %v1089
        %v1091 = vrot.slane %v1090, 2
        %v1092 = vadd.f32 %v1090, %v1091
        %v1093 = vrot.slane %v1092, 1
        %v1094 = vadd.f32 %v1092, %v1093
        %v1095 = vadd.f32 %v988, %v989
        %v1096 = vrot.slane %v1095, 4
        %v1097 = vadd.f32 %v1095, %v1096
        %v1098 = vrot.slane %v1097, 2
        %v1099 = vadd.f32 %v1097, %v1098
        %v1100 = vrot.slane %v1099, 1
        %v1101 = vadd.f32 %v1099, %v1100
        %v1102 = vmul.f32 %v996, 0.0625
        %v1103 = vmul.f32 %v1003, 0.0625
        %v1104 = vmul.f32 %v1010, 0.0625
        %v1105 = vmul.f32 %v1017, 0.0625
        %v1106 = vmul.f32 %v1024, 0.0625
        %v1107 = vmul.f32 %v1031, 0.0625
        %v1108 = vmul.f32 %v1038, 0.0625
        %v1109 = vmul.f32 %v1045, 0.0625
        %v1110 = vmul.f32 %v1052, 0.0625
        %v1111 = vmul.f32 %v1059, 0.0625
        %v1112 = vmul.f32 %v1066, 0.0625
        %v1113 = vmul.f32 %v1073, 0.0625
        %v1114 = vmul.f32 %v1080, 0.0625
        %v1115 = vmul.f32 %v1087, 0.0625
        %v1116 = vmul.f32 %v1094, 0.0625
        %v1117 = vmul.f32 %v1101, 0.0625
        %v1118 = vld [vmem:[#allocation7] sm:$0xff]
        %v1119 = vld [vmem:[#allocation7 + $0x8] sm:$0xff]
        %v1120 = vld [vmem:[#allocation7 + $0x10] sm:$0xff]
        %v1121 = vld [vmem:[#allocation7 + $0x18] sm:$0xff]
        %v1122 = vld [vmem:[#allocation7 + $0x20] sm:$0xff]
        %v1123 = vld [vmem:[#allocation7 + $0x28] sm:$0xff]
        %v1124 = vld [vmem:[#allocation7 + $0x30] sm:$0xff]
        %v1125 = vld [vmem:[#allocation7 + $0x38] sm:$0xff]
        %v1126 = vld [vmem:[#allocation7 + $0x40] sm:$0xff]
        %v1127 = vld [vmem:[#allocation7 + $0x48] sm:$0xff]
        %v1128 = vld [vmem:[#allocation7 + $0x50] sm:$0xff]
        %v1129 = vld [vmem:[#allocation7 + $0x58] sm:$0xff]
        %v1130 = vld [vmem:[#allocation7 + $0x60] sm:$0xff]
        %v1131 = vld [vmem:[#allocation7 + $0x68] sm:$0xff]
        %v1132 = vld [vmem:[#allocation7 + $0x70] sm:$0xff]
        %v1133 = vld [vmem:[#allocation7 + $0x78] sm:$0xff]
        %v1134 = vld [vmem:[%s4] sm:$0x1]
        %v1136 = vlaneseq
        %v1137 = vshrl.u32 %v1136, 7
        %v1138 = vsub.s32 0, %v1137
        %v1139 = vrot.slane %v1134, %v1138
        %vm1157 = vcmask 1041409
        %v1158 = vsel %vm1157, %v1103, %v1102
        %vm1159 = vcmask 1042434
        %v1160 = vsel %vm1159, %v1104, %v1158
        %vm1161 = vcmask 1043459
        %v1162 = vsel %vm1161, %v1105, %v1160
        %vm1163 = vcmask 1044484
        %v1164 = vsel %vm1163, %v1106, %v1162
        %vm1165 = vcmask 1045509
        %v1166 = vsel %vm1165, %v1107, %v1164
        %vm1167 = vcmask 1046534
        %v1168 = vsel %vm1167, %v1108, %v1166
        %vm1169 = vcmask 1047559
        %v1170 = vsel %vm1169, %v1109, %v1168
        %v1171 = vsel %vm1157, %v1111, %v1110
        %v1172 = vsel %vm1159, %v1112, %v1171
        %v1173 = vsel %vm1161, %v1113, %v1172
        %v1174 = vsel %vm1163, %v1114, %v1173
        %v1175 = vsel %vm1165, %v1115, %v1174
        %v1176 = vsel %vm1167, %v1116, %v1175
        %v1177 = vsel %vm1169, %v1117, %v1176
        %1180 = vmatprep.subr.mxu0 0.0
        %1181 = vmatpush1.msra.mxu0 %v1118
        %1182 = vmatprep.subr.mxu0 0.0
        %1183 = vmatpush1.msra.mxu0 %v1119
        %1184 = vmatprep.subr.mxu0 0.0
        %1185 = vmatpush1.msra.mxu0 %v1120
        %1186 = vmatprep.subr.mxu0 0.0
        %1187 = vmatpush1.msra.mxu0 %v1121
        %1188 = vmatprep.subr.mxu0 0.0
        %1189 = vmatpush1.msra.mxu0 %v1122
        %1190 = vmatprep.subr.mxu0 0.0
        %1191 = vmatpush1.msra.mxu0 %v1123
        %1192 = vmatprep.subr.mxu0 0.0
        %1193 = vmatpush1.msra.mxu0 %v1124
        %1194 = vmatprep.subr.mxu0 0.0
        %1195 = vmatpush1.msra.mxu0 %v1125
        %1196 = vmatprep.subr.mxu0 0.0
        %1197 = vmatpush1.msra.mxu0 %v1126
        %1198 = vmatprep.subr.mxu0 0.0
        %1199 = vmatpush1.msra.mxu0 %v1127
        %1200 = vmatprep.subr.mxu0 0.0
        %1201 = vmatpush1.msra.mxu0 %v1128
        %1202 = vmatprep.subr.mxu0 0.0
        %1203 = vmatpush1.msra.mxu0 %v1129
        %1204 = vmatprep.subr.mxu0 0.0
        %1205 = vmatpush1.msra.mxu0 %v1130
        %1206 = vmatprep.subr.mxu0 0.0
        %1207 = vmatpush1.msra.mxu0 %v1131
        %1208 = vmatprep.subr.mxu0 0.0
        %1209 = vmatpush1.msra.mxu0 %v1132
        %1210 = vmatprep.subr.mxu0 0.0
        %1211 = vmatpush1.msra.mxu0 %v1133
        %1212 = vmatprep.subr.mxu0 0.0
        %1213 = vmatpush1.msra.mxu0 0.0
        %1214 = vmatprep.subr.mxu0 0.0
        %1215 = vmatpush1.msra.mxu0 0.0
        %1216 = vmatprep.subr.mxu0 0.0
        %1217 = vmatpush1.msra.mxu0 0.0
        %1218 = vmatprep.subr.mxu0 0.0
        %1219 = vmatpush1.msra.mxu0 0.0
        %1220 = vmatprep.subr.mxu0 0.0
        %1221 = vmatpush1.msra.mxu0 0.0
        %1222 = vmatprep.subr.mxu0 0.0
        %1223 = vmatpush1.msra.mxu0 0.0
        %1224 = vmatprep.subr.mxu0 0.0
        %1225 = vmatpush1.msra.mxu0 0.0
        %1226 = vmatprep.subr.mxu0 0.0
        %1227 = vmatpush1.msra.mxu0 0.0
        %1228 = vmatprep.subr.mxu0 0.0
        %1229 = vmatpush1.msra.mxu0 0.0
        %1230 = vmatprep.subr.mxu0 0.0
        %1231 = vmatpush1.msra.mxu0 0.0
        %1232 = vmatprep.subr.mxu0 0.0
        %1233 = vmatpush1.msra.mxu0 0.0
        %1234 = vmatprep.subr.mxu0 0.0
        %1235 = vmatpush1.msra.mxu0 0.0
        %1236 = vmatprep.subr.mxu0 0.0
        %1237 = vmatpush1.msra.mxu0 0.0
        %1238 = vmatprep.subr.mxu0 0.0
        %1239 = vmatpush1.msra.mxu0 0.0
        %1240 = vmatprep.subr.mxu0 0.0
        %1241 = vmatpush1.msra.mxu0 0.0
        %1242 = vmatprep.subr.mxu0 0.0
        %1243 = vmatpush1.msra.mxu0 0.0
        %1244 = vmatprep.mubr.f32.mxu0 0.0
        %1245 = vmatmul.mubr.f32.gmra.mrb[0].mxu0 %v1170
        %v1246 = vpop.f32.mrb[0].mxu0
        %v1247 = vadd.f32 %v1139, %v1246
        %v1248 = vpop.f32.mrb[0].mxu0
        %1249 = vmatprep.mubr.f32.mxu0 0.0
        %1250 = vmatmul.mubr.f32.gmra.mrb[0].mxu0 %v1177
        %v1251 = vpop.f32.mrb[0].mxu0
        %v1252 = vadd.f32 %v1139, %v1251
        %v1253 = vpop.f32.mrb[0].mxu0
        %1254 = vdwg.mxu0
        %1255 = vst [vmem:[%s272] sm:$0xff] %v1247
        %1256 = vst [vmem:[%s272 + $0x8] sm:$0xff] %v1252
        %s1257 = sand.u32 %s141, 1
        %s1258 = scalar_lea.sflag [#allocation4], %s1257
        %s1259 = sand.u32 %s141, 1
        %s1260 = smul.addr %s1259, 16
        %s1261 = scalar_lea.vmem [#allocation8], %s1260
        // Predicated region
        $region53: #{tpu_custom_call.1} parent=39 // pred_check
          %p1262 = pneg %p151
        $region54: #{tpu_custom_call.1} parent=39 // pred_check_branch
          %1264 = sbr.rel (%p1262) target = $region56
        $region55: #{tpu_custom_call.1} parent=39 // pred_region
          %s1265 = smul.u32 2, %s23
          %s1267 = ssub.s32 256, 256
          %1268 = vsyncadd %s1258, %s1267
          %s1269 = smul.addr %s1265, 128
          %s1270 = scalar_lea.hbm %s5, %s1269
          %s1271 = sshll.u32 %s1261, 4
          %s1272 = int_to_ptr.vmem [resolvable:$true] %s1271
          %1277 = dma.vmem_to_hbm [thread:$0]  %s1272, 256, %s1270, %s1258, 128, 128, 8
        $region56: #{tpu_custom_call.1} parent=39 // pred_fallthru
          _
      $region40: #{tpu_custom_call.1} parent=5 // pred_fallthru
        _
      %p1278 = scmp.le.s32.totalorder 2, %s18
      // Predicated region
      $region57: #{tpu_custom_call.1} parent=5 // pred_check
        %p1279 = pneg %p1278
      $region58: #{tpu_custom_call.1} parent=5 // pred_check_branch
        %1281 = sbr.rel (%p1279) target = $region60
      $region59: #{tpu_custom_call.1} parent=5 // pred_region
        %s1282 = ssub.s32 %s18, 2
        // Predicated region
        $region61: #{tpu_custom_call.1} parent=59 // pred_check
          %p1283 = pneg %p157
        $region62: #{tpu_custom_call.1} parent=59 // pred_check_branch
          %1285 = sbr.rel (%p1283) target = $region64
        $region63: #{tpu_custom_call.1} parent=59 // pred_region
          %s1286 = sand.u32 %s142, 1
          %s1287 = scalar_lea.sflag [#allocation4], %s1286
          %s1288 = sand.u32 %s142, 1
          %s1289 = smul.addr %s1288, 16
          %s1290 = scalar_lea.vmem [#allocation8], %s1289
          %1291 = dma.done %s1287, 256
        $region64: #{tpu_custom_call.1} parent=59 // pred_fallthru
          _
      $region60: #{tpu_custom_call.1} parent=5 // pred_fallthru
        _
    $region6: #{tpu_custom_call.1} parent=1 // loop_footer
      %s22 = sadd.s32 1, %s18
    $region7: #{tpu_custom_call.1} parent=1 // loop_footer_branch
      %17 = sbr.rel target = $region3
    $region8: #{tpu_custom_call.1} parent=1 // loop_exit
      _
    %1292 = vsyncpa [#allocation3], 1
    %s1293 = scalar_lea.sflag [#allocation3], 1
    %1294 = vsyncpa %s1293, 1
    %1295 = vsyncpa [#allocation6], 1
    %1296 = vsyncpa [#allocation4], 1
    %s1297 = scalar_lea.sflag [#allocation4], 1
    %1298 = vsyncpa %s1297, 1

// kernel: tpu_custom_call.1
$region0: #{tpu_custom_call.1}
  #allocation0 [shape = 'u32[]', space=smem, size = 0x4, offset = 0x4, fixed_abs, tag = 'smem constant byte address 0x4 - core index']
  #allocation1 [shape = 'u32[144,128]{1,0:T(1,128)}', space=vmem, size = 0x12000, scoped, tag = 'internal scratch']
  %s0 = inlined_call_operand.hbm [shape: bf16[64,16,64], index: 0, kind: input, shape index: {}]
  %s1 = inlined_call_operand.hbm [shape: bf16[64,128], index: 1, kind: input, shape index: {}]
  %s2 = inlined_call_operand.vmem [shape: f32[1,128], index: 2, kind: input, shape index: {}]
  %s3 = inlined_call_operand.hbm [shape: f32[128,128], index: 3, kind: input, shape index: {}]
  %s4 = inlined_call_operand.vmem [shape: f32[1,128], index: 4, kind: input, shape index: {}]
  %s5 = inlined_call_operand.hbm [shape: f32[64,128], index: 5, kind: output, shape index: {}]
  %s6 = sld [smem:[#allocation0]]
  $region65: #{tpu_custom_call.1} parent=0
    _
  %s8 = ssub.s32 1, %s6
  %s9 = scalar_select 0, %s8, %s6
  $region1: #{tpu_custom_call.1} parent=0
    #allocation2 [shape = 'u8[131072]{0}', space=vmem, size = 0x20000, scoped, tag = 'input window, operand 0']
    #allocation3 [shape = 's32[2]{0}', space=sflag, size = 0x8, scoped, tag = 'scoped memory for tpu_custom_call.1']
    #allocation4 [shape = 's32[2]{0}', space=sflag, size = 0x8, scoped, tag = 'scoped memory for tpu_custom_call.1']
    #allocation5 [shape = 'u8[16384]{0}', space=vmem, size = 0x4000, scoped, tag = 'input window, operand 1, single buffered']
    #allocation6 [shape = 's32[1]{0}', space=sflag, size = 0x4, scoped, tag = 'scoped memory for tpu_custom_call.1']
    #allocation7 [shape = 'u8[65536]{0}', space=vmem, size = 0x10000, scoped, tag = 'input window, operand 3, single buffered']
    #allocation8 [shape = 'u8[16384]{0}', space=vmem, size = 0x4000, scoped, tag = 'output window, operand 0']
    %10 = vsyncpa [#allocation3], 0
    %s11 = scalar_lea.sflag [#allocation3], 1
    %12 = vsyncpa %s11, 0
    %13 = vsyncpa [#allocation6], 0
    %14 = vsyncpa [#allocation4], 0
    %s15 = scalar_lea.sflag [#allocation4], 1
    %16 = vsyncpa %s15, 0
    loop: start=0, step=1, limit=6
    $region2: #{tpu_custom_call.1} parent=1 // loop_pre_header
      _
    $region3: #{tpu_custom_call.1} parent=1 // loop_header
      %s18 = sphi 0, %s22
      %p19 = scmp.ge.s32.totalorder %s18, 6
      %s28 = sphi 0, %s30
      %s31 = sphi 0, %s28
      %s32 = sphi 0, %s31
      %s48 = sphi 0, %s32
      %s52 = sphi 0, %s52
      %s54 = sphi 0, %s52
      %s55 = sphi 0, %s54
      %s69 = sphi 0, %s55
      %s73 = sphi 0, %s73
      %s75 = sphi 0, %s73
      %s76 = sphi 0, %s75
      %s90 = sphi 0, %s76
      %s94 = sphi 0, %s94
      %s96 = sphi 0, %s94
      %s97 = sphi 0, %s96
      %s111 = sphi 0, %s97
      %s115 = sphi 0, %s115
      %s117 = sphi 0, %s115
      %s118 = sphi 0, %s117
      %s132 = sphi 0, %s118
      %s138 = sphi 0, %s140
      %s141 = sphi 0, %s138
      %s142 = sphi 0, %s141
      %s158 = sphi 0, %s142
    $region4: #{tpu_custom_call.1} parent=1 // loop_header_branch
      %21 = sbr.rel (%p19) target = $region8
    $region5: #{tpu_custom_call.1} parent=1 // loop_body
      %s23 = ssub.s32 %s18, 1
      %s24 = ssub.s32 %s18, 2
      %s25 = sadd.s32 %s18, 1
      %s26 = ssub.s32 %s18, %s25
      %p27 = scmp.eq.s32.totalorder %s26, 0
      %s29 = sadd.s32 %s28, 1
      %s30 = scalar_select %p27, %s28, %s29
      %p33 = pneg %p27
      %p34 = scmp.eq.s32.totalorder %s18, 3
      %p35 = por %p33, %p34
      %p36 = scmp.ne.s32.totalorder %s28, %s31
      %p37 = scmp.eq.s32.totalorder %s18, 0
      %p38 = por %p36, %p37
      %p39 = scmp.ne.s32.totalorder %s28, %s31
      %p40 = scmp.eq.s32.totalorder %s23, 3
      %p41 = por %p39, %p40
      %p42 = scmp.ne.s32.totalorder %s31, %s32
      %p43 = scmp.eq.s32.totalorder %s23, 0
      %p44 = por %p42, %p43
      %p45 = scmp.ne.s32.totalorder %s31, %s32
      %p46 = scmp.eq.s32.totalorder %s24, 3
      %p47 = por %p45, %p46
      %p49 = scmp.ne.s32.totalorder %s32, %s48
      %p50 = scmp.eq.s32.totalorder %s24, 0
      %p51 = por %p49, %p50
      %s53 = sadd.s32 %s52, 1
      %p56 = scmp.eq.s32.totalorder %s18, 3
      %p57 = scmp.ne.s32.totalorder %s52, %s54
      %p58 = scmp.eq.s32.totalorder %s18, 0
      %p59 = por %p57, %p58
      %p60 = scmp.ne.s32.totalorder %s52, %s54
      %p61 = scmp.eq.s32.totalorder %s23, 3
      %p62 = por %p60, %p61
      %p63 = scmp.ne.s32.totalorder %s54, %s55
      %p64 = scmp.eq.s32.totalorder %s23, 0
      %p65 = por %p63, %p64
      %p66 = scmp.ne.s32.totalorder %s54, %s55
      %p67 = scmp.eq.s32.totalorder %s24, 3
      %p68 = por %p66, %p67
      %p70 = scmp.ne.s32.totalorder %s55, %s69
      %p71 = scmp.eq.s32.totalorder %s24, 0
      %p72 = por %p70, %p71
      %s74 = sadd.s32 %s73, 1
      %p77 = scmp.eq.s32.totalorder %s18, 3
      %p78 = scmp.ne.s32.totalorder %s73, %s75
      %p79 = scmp.eq.s32.totalorder %s18, 0
      %p80 = por %p78, %p79
      %p81 = scmp.ne.s32.totalorder %s73, %s75
      %p82 = scmp.eq.s32.totalorder %s23, 3
      %p83 = por %p81, %p82
      %p84 = scmp.ne.s32.totalorder %s75, %s76
      %p85 = scmp.eq.s32.totalorder %s23, 0
      %p86 = por %p84, %p85
      %p87 = scmp.ne.s32.totalorder %s75, %s76
      %p88 = scmp.eq.s32.totalorder %s24, 3
      %p89 = por %p87, %p88
      %p91 = scmp.ne.s32.totalorder %s76, %s90
      %p92 = scmp.eq.s32.totalorder %s24, 0
      %p93 = por %p91, %p92
      %s95 = sadd.s32 %s94, 1
      %p98 = scmp.eq.s32.totalorder %s18, 3
      %p99 = scmp.ne.s32.totalorder %s94, %s96
      %p100 = scmp.eq.s32.totalorder %s18, 0
      %p101 = por %p99, %p100
      %p102 = scmp.ne.s32.totalorder %s94, %s96
      %p103 = scmp.eq.s32.totalorder %s23, 3
      %p104 = por %p102, %p103
      %p105 = scmp.ne.s32.totalorder %s96, %s97
      %p106 = scmp.eq.s32.totalorder %s23, 0
      %p107 = por %p105, %p106
      %p108 = scmp.ne.s32.totalorder %s96, %s97
      %p109 = scmp.eq.s32.totalorder %s24, 3
      %p110 = por %p108, %p109
      %p112 = scmp.ne.s32.totalorder %s97, %s111
      %p113 = scmp.eq.s32.totalorder %s24, 0
      %p114 = por %p112, %p113
      %s116 = sadd.s32 %s115, 1
      %p119 = scmp.eq.s32.totalorder %s18, 3
      %p120 = scmp.ne.s32.totalorder %s115, %s117
      %p121 = scmp.eq.s32.totalorder %s18, 0
      %p122 = por %p120, %p121
      %p123 = scmp.ne.s32.totalorder %s115, %s117
      %p124 = scmp.eq.s32.totalorder %s23, 3
      %p125 = por %p123, %p124
      %p126 = scmp.ne.s32.totalorder %s117, %s118
      %p127 = scmp.eq.s32.totalorder %s23, 0
      %p128 = por %p126, %p127
      %p129 = scmp.ne.s32.totalorder %s117, %s118
      %p130 = scmp.eq.s32.totalorder %s24, 3
      %p131 = por %p129, %p130
      %p133 = scmp.ne.s32.totalorder %s118, %s132
      %p134 = scmp.eq.s32.totalorder %s24, 0
      %p135 = por %p133, %p134
      %s136 = ssub.s32 %s18, %s25
      %p137 = scmp.eq.s32.totalorder %s136, 0
      %s139 = sadd.s32 %s138, 1
      %s140 = scalar_select %p137, %s138, %s139
      %p143 = pneg %p137
      %p144 = scmp.eq.s32.totalorder %s18, 3
      %p145 = por %p143, %p144
      %p146 = scmp.ne.s32.totalorder %s138, %s141
      %p147 = scmp.eq.s32.totalorder %s18, 0
      %p148 = por %p146, %p147
      %p149 = scmp.ne.s32.totalorder %s138, %s141
      %p150 = scmp.eq.s32.totalorder %s23, 3
      %p151 = por %p149, %p150
      %p152 = scmp.ne.s32.totalorder %s141, %s142
      %p153 = scmp.eq.s32.totalorder %s23, 0
      %p154 = por %p152, %p153
      %p155 = scmp.ne.s32.totalorder %s141, %s142
      %p156 = scmp.eq.s32.totalorder %s24, 3
      %p157 = por %p155, %p156
      %p159 = scmp.ne.s32.totalorder %s142, %s158
      %p160 = scmp.eq.s32.totalorder %s24, 0
      %p161 = por %p159, %p160
      %p162 = scmp.le.s32.totalorder 1, %s18
      %p163 = scmp.lt.s32.totalorder %s18, 5
      %p164 = pnand %p162, %p163
      %p165 = pneg %p164
      // Predicated region
      $region9: #{tpu_custom_call.1} parent=5 // pred_check
        _
      $region10: #{tpu_custom_call.1} parent=5 // pred_check_branch
        %167 = sbr.rel (%p164) target = $region12
      $region11: #{tpu_custom_call.1} parent=5 // pred_region
        %s168 = ssub.s32 %s18, 1
        // Predicated region
        $region13: #{tpu_custom_call.1} parent=11 // pred_check
          %p169 = pneg %p65
        $region14: #{tpu_custom_call.1} parent=11 // pred_check_branch
          %171 = sbr.rel (%p169) target = $region16
        $region15: #{tpu_custom_call.1} parent=11 // pred_region
          %s173 = ssub.s32 512, 512
          %174 = vsyncadd [#allocation6], %s173
          %s175 = sshll.u32 [#allocation5], 4
          %s176 = int_to_ptr.vmem [resolvable:$true] %s175
          %181 = dma.hbm_to_vmem [thread:$0]  %s1, 512, %s176, [#allocation6], 64, 64, 4
        $region16: #{tpu_custom_call.1} parent=11 // pred_fallthru
          _
        // Predicated region
        $region17: #{tpu_custom_call.1} parent=11 // pred_check
          %p182 = pneg %p86
        $region18: #{tpu_custom_call.1} parent=11 // pred_check_branch
          %184 = sbr.rel (%p182) target = $region20
        $region19: #{tpu_custom_call.1} parent=11 // pred_region
          _
        $region20: #{tpu_custom_call.1} parent=11 // pred_fallthru
          _
        // Predicated region
        $region21: #{tpu_custom_call.1} parent=11 // pred_check
          %p185 = pneg %p107
        $region22: #{tpu_custom_call.1} parent=11 // pred_check_branch
          %187 = sbr.rel (%p185) target = $region24
        $region23: #{tpu_custom_call.1} parent=11 // pred_region
          %s189 = ssub.s32 2048, 2048
          %190 = vsyncadd [#allocation6], %s189
          %s191 = sshll.u32 [#allocation7], 4
          %s192 = int_to_ptr.vmem [resolvable:$true] %s191
          %197 = dma.hbm_to_vmem [thread:$0]  %s3, 2048, %s192, [#allocation6], 128, 128, 8
        $region24: #{tpu_custom_call.1} parent=11 // pred_fallthru
          _
        // Predicated region
        $region25: #{tpu_custom_call.1} parent=11 // pred_check
          %p198 = pneg %p128
        $region26: #{tpu_custom_call.1} parent=11 // pred_check_branch
          %200 = sbr.rel (%p198) target = $region28
        $region27: #{tpu_custom_call.1} parent=11 // pred_region
          _
        $region28: #{tpu_custom_call.1} parent=11 // pred_fallthru
          _
      $region12: #{tpu_custom_call.1} parent=5 // pred_fallthru
        _
      %p201 = scmp.lt.s32.totalorder %s18, 4
      // Predicated region
      $region29: #{tpu_custom_call.1} parent=5 // pred_check
        %p202 = pneg %p201
      $region30: #{tpu_custom_call.1} parent=5 // pred_check_branch
        %204 = sbr.rel (%p202) target = $region32
      $region31: #{tpu_custom_call.1} parent=5 // pred_region
        // Predicated region
        $region33: #{tpu_custom_call.1} parent=31 // pred_check
          %p205 = pneg %p38
        $region34: #{tpu_custom_call.1} parent=31 // pred_check_branch
          %207 = sbr.rel (%p205) target = $region36
        $region35: #{tpu_custom_call.1} parent=31 // pred_region
          %s208 = sand.u32 %s28, 1
          %s209 = scalar_lea.sflag [#allocation3], %s208
          %s210 = sand.u32 %s28, 1
          %s211 = smul.addr %s210, 128
          %s212 = scalar_lea.vmem [#allocation2], %s211
          %s213 = smul.u32 16, %s18
          %s215 = ssub.s32 2048, 2048
          %216 = vsyncadd %s209, %s215
          %s217 = smul.addr %s213, 2
          %s218 = smul.addr %s217, 64
          %s219 = scalar_lea.hbm %s0, %s218
          %s220 = sshll.u32 %s212, 4
          %s221 = int_to_ptr.vmem [resolvable:$true] %s220
          %226 = dma.hbm_to_vmem [thread:$0]  %s219, 2048, %s221, %s209, 64, 64, 4
        $region36: #{tpu_custom_call.1} parent=31 // pred_fallthru
          _
      $region32: #{tpu_custom_call.1} parent=5 // pred_fallthru
        _
      %p227 = scmp.le.s32.totalorder 1, %s18
      %p228 = scmp.lt.s32.totalorder %s18, 5
      %p229 = pnand %p227, %p228
      %p230 = pneg %p229
      // Predicated region
      $region37: #{tpu_custom_call.1} parent=5 // pred_check
        _
      $region38: #{tpu_custom_call.1} parent=5 // pred_check_branch
        %232 = sbr.rel (%p229) target = $region40
      $region39: #{tpu_custom_call.1} parent=5 // pred_region
        %s233 = ssub.s32 %s18, 1
        %s234 = sand.u32 %s31, 1
        %s235 = scalar_lea.sflag [#allocation3], %s234
        %s236 = sand.u32 %s31, 1
        %s237 = smul.addr %s236, 128
        %s238 = scalar_lea.vmem [#allocation2], %s237
        // Predicated region
        $region41: #{tpu_custom_call.1} parent=39 // pred_check
          %p239 = pneg %p44
        $region42: #{tpu_custom_call.1} parent=39 // pred_check_branch
          %241 = sbr.rel (%p239) target = $region44
        $region43: #{tpu_custom_call.1} parent=39 // pred_region
          %242 = dma.done %s235, 2048
        $region44: #{tpu_custom_call.1} parent=39 // pred_fallthru
          _
        // Predicated region
        $region45: #{tpu_custom_call.1} parent=39 // pred_check
          %p243 = pneg %p65
        $region46: #{tpu_custom_call.1} parent=39 // pred_check_branch
          %245 = sbr.rel (%p243) target = $region48
        $region47: #{tpu_custom_call.1} parent=39 // pred_region
          %246 = dma.done [#allocation6], 512
        $region48: #{tpu_custom_call.1} parent=39 // pred_fallthru
          _
        // Predicated region
        $region49: #{tpu_custom_call.1} parent=39 // pred_check
          %p247 = pneg %p107
        $region50: #{tpu_custom_call.1} parent=39 // pred_check_branch
          %249 = sbr.rel (%p247) target = $region52
        $region51: #{tpu_custom_call.1} parent=39 // pred_region
          %250 = dma.done [#allocation6], 2048
        $region52: #{tpu_custom_call.1} parent=39 // pred_fallthru
          _
        %s251 = sand.u32 %s31, 1
        %s252 = scalar_lea.sflag [#allocation3], %s251
        %s253 = sand.u32 %s31, 1
        %s254 = smul.addr %s253, 128
        %s255 = scalar_lea.vmem [#allocation2], %s254
        %p256 = pneg %p44
        %p257 = pneg %p41
        %p258 = pneg %p65
        %p259 = pneg %p62
        %p260 = pneg %p86
        %p261 = pneg %p83
        %p262 = pneg %p107
        %p263 = pneg %p104
        %p264 = pneg %p128
        %p265 = pneg %p125
        %p266 = pneg %p154
        %p267 = pneg %p151
        %s268 = sand.u32 %s141, 1
        %s269 = scalar_lea.sflag [#allocation4], %s268
        %s270 = sand.u32 %s141, 1
        %s271 = smul.addr %s270, 16
        %s272 = scalar_lea.vmem [#allocation8], %s271
        %s273 = smul.u32 16, %s23
        %s274 = smul.u32 2, %s23
        %v276 = vld [vmem:[%s238] sm:$0xf]
        %v277 = vld [vmem:[%s238 + $0x4] sm:$0xf]
        %v278 = vld [vmem:[%s238 + $0x8] sm:$0xf]
        %v279 = vld [vmem:[%s238 + $0xc] sm:$0xf]
        %v280 = vld [vmem:[%s238 + $0x10] sm:$0xf]
        %v281 = vld [vmem:[%s238 + $0x14] sm:$0xf]
        %v282 = vld [vmem:[%s238 + $0x18] sm:$0xf]
        %v283 = vld [vmem:[%s238 + $0x1c] sm:$0xf]
        %v284 = vld [vmem:[%s238 + $0x20] sm:$0xf]
        %v285 = vld [vmem:[%s238 + $0x24] sm:$0xf]
        %v286 = vld [vmem:[%s238 + $0x28] sm:$0xf]
        %v287 = vld [vmem:[%s238 + $0x2c] sm:$0xf]
        %v288 = vld [vmem:[%s238 + $0x30] sm:$0xf]
        %v289 = vld [vmem:[%s238 + $0x34] sm:$0xf]
        %v290 = vld [vmem:[%s238 + $0x38] sm:$0xf]
        %v291 = vld [vmem:[%s238 + $0x3c] sm:$0xf]
        %v292 = vld [vmem:[%s238 + $0x40] sm:$0xf]
        %v293 = vld [vmem:[%s238 + $0x44] sm:$0xf]
        %v294 = vld [vmem:[%s238 + $0x48] sm:$0xf]
        %v295 = vld [vmem:[%s238 + $0x4c] sm:$0xf]
        %v296 = vld [vmem:[%s238 + $0x50] sm:$0xf]
        %v297 = vld [vmem:[%s238 + $0x54] sm:$0xf]
        %v298 = vld [vmem:[%s238 + $0x58] sm:$0xf]
        %v299 = vld [vmem:[%s238 + $0x5c] sm:$0xf]
        %v300 = vld [vmem:[%s238 + $0x60] sm:$0xf]
        %v301 = vld [vmem:[%s238 + $0x64] sm:$0xf]
        %v302 = vld [vmem:[%s238 + $0x68] sm:$0xf]
        %v303 = vld [vmem:[%s238 + $0x6c] sm:$0xf]
        %v304 = vld [vmem:[%s238 + $0x70] sm:$0xf]
        %v305 = vld [vmem:[%s238 + $0x74] sm:$0xf]
        %v306 = vld [vmem:[%s238 + $0x78] sm:$0xf]
        %v307 = vld [vmem:[%s238 + $0x7c] sm:$0xf]
        %v308 = vld [vmem:[#allocation5] sm:$0xf]
        %v309 = vld [vmem:[#allocation5 + $0x4] sm:$0xf]
        %v310 = vld [vmem:[#allocation5 + $0x8] sm:$0xf]
        %v311 = vld [vmem:[#allocation5 + $0xc] sm:$0xf]
        %v312 = vld [vmem:[#allocation5 + $0x10] sm:$0xf]
        %v313 = vld [vmem:[#allocation5 + $0x14] sm:$0xf]
        %v314 = vld [vmem:[#allocation5 + $0x18] sm:$0xf]
        %v315 = vld [vmem:[#allocation5 + $0x1c] sm:$0xf]
        %v316 = vld [vmem:[%s2] sm:$0x1]
        %v318 = vlaneseq
        %v319 = vshrl.u32 %v318, 7
        %v320 = vsub.s32 0, %v319
        %v321 = vrot.slane %v316, %v320
        %v355 = vunpack.c.l.b16 %v276
        %v356 = vunpack.c.l.b16 %v277
        %v357 = vunpack.c.l.b16 %v278
        %v358 = vunpack.c.l.b16 %v279
        %v359 = vunpack.c.l.b16 %v280
        %v360 = vunpack.c.l.b16 %v281
        %v361 = vunpack.c.l.b16 %v282
        %v362 = vunpack.c.l.b16 %v283
        %v363 = vunpack.c.l.b16 %v284
        %v364 = vunpack.c.l.b16 %v285
        %v365 = vunpack.c.l.b16 %v286
        %v366 = vunpack.c.l.b16 %v287
        %v367 = vunpack.c.l.b16 %v288
        %v368 = vunpack.c.l.b16 %v289
        %v369 = vunpack.c.l.b16 %v290
        %v370 = vunpack.c.l.b16 %v291
        %v371 = vunpack.c.l.b16 %v292
        %v372 = vunpack.c.l.b16 %v293
        %v373 = vunpack.c.l.b16 %v294
        %v374 = vunpack.c.l.b16 %v295
        %v375 = vunpack.c.l.b16 %v296
        %v376 = vunpack.c.l.b16 %v297
        %v377 = vunpack.c.l.b16 %v298
        %v378 = vunpack.c.l.b16 %v299
        %v379 = vunpack.c.l.b16 %v300
        %v380 = vunpack.c.l.b16 %v301
        %v381 = vunpack.c.l.b16 %v302
        %v382 = vunpack.c.l.b16 %v303
        %v383 = vunpack.c.l.b16 %v304
        %v384 = vunpack.c.l.b16 %v305
        %v385 = vunpack.c.l.b16 %v306
        %v386 = vunpack.c.l.b16 %v307
        %v387 = vpack.c.b16 %v356, %v355
        %v388 = vpack.c.b16 %v358, %v357
        %v389 = vpack.c.b16 %v360, %v359
        %v390 = vpack.c.b16 %v362, %v361
        %v391 = vpack.c.b16 %v364, %v363
        %v392 = vpack.c.b16 %v366, %v365
        %v393 = vpack.c.b16 %v368, %v367
        %v394 = vpack.c.b16 %v370, %v369
        %v395 = vpack.c.b16 %v372, %v371
        %v396 = vpack.c.b16 %v374, %v373
        %v397 = vpack.c.b16 %v376, %v375
        %v398 = vpack.c.b16 %v378, %v377
        %v399 = vpack.c.b16 %v380, %v379
        %v400 = vpack.c.b16 %v382, %v381
        %v401 = vpack.c.b16 %v384, %v383
        %v402 = vpack.c.b16 %v386, %v385
        %v411 = vunpack.c.l.b16 %v308
        %v412 = vunpack.c.l.b16 %v309
        %v413 = vunpack.c.l.b16 %v310
        %v414 = vunpack.c.l.b16 %v311
        %v415 = vunpack.c.l.b16 %v312
        %v416 = vunpack.c.l.b16 %v313
        %v417 = vunpack.c.l.b16 %v314
        %v418 = vunpack.c.l.b16 %v315
        %v419 = vpack.c.b16 %v412, %v411
        %v420 = vpack.c.b16 %v414, %v413
        %v421 = vpack.c.b16 %v416, %v415
        %v422 = vpack.c.b16 %v418, %v417
        %vm427 = vcmask 523264
        %v429 = vsel %vm427, %v387, 0
        %v432 = vsel %vm427, %v388, 0
        %v435 = vsel %vm427, %v389, 0
        %v438 = vsel %vm427, %v390, 0
        %v441 = vsel %vm427, %v391, 0
        %v444 = vsel %vm427, %v392, 0
        %v447 = vsel %vm427, %v393, 0
        %v450 = vsel %vm427, %v394, 0
        %v453 = vsel %vm427, %v395, 0
        %v456 = vsel %vm427, %v396, 0
        %v459 = vsel %vm427, %v397, 0
        %v462 = vsel %vm427, %v398, 0
        %v465 = vsel %vm427, %v399, 0
        %v468 = vsel %vm427, %v400, 0
        %v471 = vsel %vm427, %v401, 0
        %v474 = vsel %vm427, %v402, 0
        %476 = vmatprep.subr.bf16.mxu0 0
        %477 = vmatpush1.bf16.msra.mxu0 %v419
        %478 = vmatprep.subr.bf16.mxu0 0
        %479 = vmatpush1.bf16.msra.mxu0 %v420
        %480 = vmatprep.subr.bf16.mxu0 0
        %481 = vmatpush1.bf16.msra.mxu0 %v421
        %482 = vmatprep.subr.bf16.mxu0 0
        %483 = vmatpush1.bf16.msra.mxu0 %v422
        %484 = vmatprep.subr.bf16.mxu0 0
        %485 = vmatpush1.bf16.msra.mxu0 0
        %486 = vmatprep.subr.bf16.mxu0 0
        %487 = vmatpush1.bf16.msra.mxu0 0
        %488 = vmatprep.subr.bf16.mxu0 0
        %489 = vmatpush1.bf16.msra.mxu0 0
        %490 = vmatprep.subr.bf16.mxu0 0
        %491 = vmatpush1.bf16.msra.mxu0 0
        %492 = vmatprep.subr.bf16.mxu0 0
        %493 = vmatpush1.bf16.msra.mxu0 0
        %494 = vmatprep.subr.bf16.mxu0 0
        %495 = vmatpush1.bf16.msra.mxu0 0
        %496 = vmatprep.subr.bf16.mxu0 0
        %497 = vmatpush1.bf16.msra.mxu0 0
        %498 = vmatprep.subr.bf16.mxu0 0
        %499 = vmatpush1.bf16.msra.mxu0 0
        %500 = vmatprep.subr.bf16.mxu0 0
        %501 = vmatpush1.bf16.msra.mxu0 0
        %502 = vmatprep.subr.bf16.mxu0 0
        %503 = vmatpush1.bf16.msra.mxu0 0
        %504 = vmatprep.subr.bf16.mxu0 0
        %505 = vmatpush1.bf16.msra.mxu0 0
        %506 = vmatprep.subr.bf16.mxu0 0
        %507 = vmatpush1.bf16.msra.mxu0 0
        %508 = vmatprep.mubr.bf16.mxu0 0
        %509 = vmatmul.mubr.bf16.gmra.mrb[0].mxu0 %v429
        %v510 = vpop.f32.mrb[0].mxu0
        %v511 = vadd.f32 %v321, %v510
        %v512 = vpop.f32.mrb[0].mxu0
        %v513 = vpop.f32.mrb[0].mxu0
        %v514 = vadd.f32 %v321, %v513
        %v515 = vpop.f32.mrb[0].mxu0
        %516 = vmatprep.mubr.bf16.mxu0 0
        %517 = vmatmul.mubr.bf16.gmra.mrb[0].mxu0 %v432
        %v518 = vpop.f32.mrb[0].mxu0
        %v519 = vadd.f32 %v321, %v518
        %v520 = vpop.f32.mrb[0].mxu0
        %v521 = vpop.f32.mrb[0].mxu0
        %v522 = vadd.f32 %v321, %v521
        %v523 = vpop.f32.mrb[0].mxu0
        %524 = vmatprep.mubr.bf16.mxu0 0
        %525 = vmatmul.mubr.bf16.gmra.mrb[0].mxu0 %v435
        %v526 = vpop.f32.mrb[0].mxu0
        %v527 = vadd.f32 %v321, %v526
        %v528 = vpop.f32.mrb[0].mxu0
        %v529 = vpop.f32.mrb[0].mxu0
        %v530 = vadd.f32 %v321, %v529
        %v531 = vpop.f32.mrb[0].mxu0
        %532 = vmatprep.mubr.bf16.mxu0 0
        %533 = vmatmul.mubr.bf16.gmra.mrb[0].mxu0 %v438
        %v534 = vpop.f32.mrb[0].mxu0
        %v535 = vadd.f32 %v321, %v534
        %v536 = vpop.f32.mrb[0].mxu0
        %v537 = vpop.f32.mrb[0].mxu0
        %v538 = vadd.f32 %v321, %v537
        %v539 = vpop.f32.mrb[0].mxu0
        %540 = vmatprep.mubr.bf16.mxu0 0
        %541 = vmatmul.mubr.bf16.gmra.mrb[0].mxu0 %v441
        %v542 = vpop.f32.mrb[0].mxu0
        %v543 = vadd.f32 %v321, %v542
        %v544 = vpop.f32.mrb[0].mxu0
        %v545 = vpop.f32.mrb[0].mxu0
        %v546 = vadd.f32 %v321, %v545
        %v547 = vpop.f32.mrb[0].mxu0
        %548 = vmatprep.mubr.bf16.mxu0 0
        %549 = vmatmul.mubr.bf16.gmra.mrb[0].mxu0 %v444
        %v550 = vpop.f32.mrb[0].mxu0
        %v551 = vadd.f32 %v321, %v550
        %v552 = vpop.f32.mrb[0].mxu0
        %v553 = vpop.f32.mrb[0].mxu0
        %v554 = vadd.f32 %v321, %v553
        %v555 = vpop.f32.mrb[0].mxu0
        %556 = vmatprep.mubr.bf16.mxu0 0
        %557 = vmatmul.mubr.bf16.gmra.mrb[0].mxu0 %v447
        %v558 = vpop.f32.mrb[0].mxu0
        %v559 = vadd.f32 %v321, %v558
        %v560 = vpop.f32.mrb[0].mxu0
        %v561 = vpop.f32.mrb[0].mxu0
        %v562 = vadd.f32 %v321, %v561
        %v563 = vpop.f32.mrb[0].mxu0
        %564 = vmatprep.mubr.bf16.mxu0 0
        %565 = vmatmul.mubr.bf16.gmra.mrb[0].mxu0 %v450
        %v566 = vpop.f32.mrb[0].mxu0
        %v567 = vadd.f32 %v321, %v566
        %v568 = vpop.f32.mrb[0].mxu0
        %v569 = vpop.f32.mrb[0].mxu0
        %v570 = vadd.f32 %v321, %v569
        %v571 = vpop.f32.mrb[0].mxu0
        %572 = vmatprep.mubr.bf16.mxu0 0
        %573 = vmatmul.mubr.bf16.gmra.mrb[0].mxu0 %v453
        %v574 = vpop.f32.mrb[0].mxu0
        %v575 = vadd.f32 %v321, %v574
        %v576 = vpop.f32.mrb[0].mxu0
        %v577 = vpop.f32.mrb[0].mxu0
        %v578 = vadd.f32 %v321, %v577
        %v579 = vpop.f32.mrb[0].mxu0
        %580 = vmatprep.mubr.bf16.mxu0 0
        %581 = vmatmul.mubr.bf16.gmra.mrb[0].mxu0 %v456
        %v582 = vpop.f32.mrb[0].mxu0
        %v583 = vadd.f32 %v321, %v582
        %v584 = vpop.f32.mrb[0].mxu0
        %v585 = vpop.f32.mrb[0].mxu0
        %v586 = vadd.f32 %v321, %v585
        %v587 = vpop.f32.mrb[0].mxu0
        %588 = vmatprep.mubr.bf16.mxu0 0
        %589 = vmatmul.mubr.bf16.gmra.mrb[0].mxu0 %v459
        %v590 = vpop.f32.mrb[0].mxu0
        %v591 = vadd.f32 %v321, %v590
        %v592 = vpop.f32.mrb[0].mxu0
        %v593 = vpop.f32.mrb[0].mxu0
        %v594 = vadd.f32 %v321, %v593
        %v595 = vpop.f32.mrb[0].mxu0
        %596 = vmatprep.mubr.bf16.mxu0 0
        %597 = vmatmul.mubr.bf16.gmra.mrb[0].mxu0 %v462
        %v598 = vpop.f32.mrb[0].mxu0
        %v599 = vadd.f32 %v321, %v598
        %v600 = vpop.f32.mrb[0].mxu0
        %v601 = vpop.f32.mrb[0].mxu0
        %v602 = vadd.f32 %v321, %v601
        %v603 = vpop.f32.mrb[0].mxu0
        %604 = vmatprep.mubr.bf16.mxu0 0
        %605 = vmatmul.mubr.bf16.gmra.mrb[0].mxu0 %v465
        %v606 = vpop.f32.mrb[0].mxu0
        %v607 = vadd.f32 %v321, %v606
        %v608 = vpop.f32.mrb[0].mxu0
        %v609 = vpop.f32.mrb[0].mxu0
        %v610 = vadd.f32 %v321, %v609
        %v611 = vpop.f32.mrb[0].mxu0
        %612 = vmatprep.mubr.bf16.mxu0 0
        %613 = vmatmul.mubr.bf16.gmra.mrb[0].mxu0 %v468
        %v614 = vpop.f32.mrb[0].mxu0
        %v615 = vadd.f32 %v321, %v614
        %v616 = vpop.f32.mrb[0].mxu0
        %v617 = vpop.f32.mrb[0].mxu0
        %v618 = vadd.f32 %v321, %v617
        %v619 = vpop.f32.mrb[0].mxu0
        %620 = vmatprep.mubr.bf16.mxu0 0
        %621 = vmatmul.mubr.bf16.gmra.mrb[0].mxu0 %v471
        %v622 = vpop.f32.mrb[0].mxu0
        %v623 = vadd.f32 %v321, %v622
        %v624 = vpop.f32.mrb[0].mxu0
        %v625 = vpop.f32.mrb[0].mxu0
        %v626 = vadd.f32 %v321, %v625
        %v627 = vpop.f32.mrb[0].mxu0
        %628 = vmatprep.mubr.bf16.mxu0 0
        %629 = vmatmul.mubr.bf16.gmra.mrb[0].mxu0 %v474
        %v630 = vpop.f32.mrb[0].mxu0
        %v631 = vadd.f32 %v321, %v630
        %v632 = vpop.f32.mrb[0].mxu0
        %v633 = vpop.f32.mrb[0].mxu0
        %v634 = vadd.f32 %v321, %v633
        %v635 = vpop.f32.mrb[0].mxu0
        %636 = vdwg.mxu0
        %637 = vadd.xlane.f32.xlu0 %v511
        %v638 = vpop.xlane.xlu0 %637
        %639 = vadd.xlane.f32.xlu0 %v514
        %v640 = vpop.xlane.xlu0 %639
        %641 = vadd.xlane.f32.xlu0 %v519
        %v642 = vpop.xlane.xlu0 %641
        %643 = vadd.xlane.f32.xlu0 %v522
        %v644 = vpop.xlane.xlu0 %643
        %645 = vadd.xlane.f32.xlu0 %v527
        %v646 = vpop.xlane.xlu0 %645
        %647 = vadd.xlane.f32.xlu0 %v530
        %v648 = vpop.xlane.xlu0 %647
        %649 = vadd.xlane.f32.xlu0 %v535
        %v650 = vpop.xlane.xlu0 %649
        %651 = vadd.xlane.f32.xlu0 %v538
        %v652 = vpop.xlane.xlu0 %651
        %653 = vadd.xlane.f32.xlu0 %v543
        %v654 = vpop.xlane.xlu0 %653
        %655 = vadd.xlane.f32.xlu0 %v546
        %v656 = vpop.xlane.xlu0 %655
        %657 = vadd.xlane.f32.xlu0 %v551
        %v658 = vpop.xlane.xlu0 %657
        %659 = vadd.xlane.f32.xlu0 %v554
        %v660 = vpop.xlane.xlu0 %659
        %661 = vadd.xlane.f32.xlu0 %v559
        %v662 = vpop.xlane.xlu0 %661
        %663 = vadd.xlane.f32.xlu0 %v562
        %v664 = vpop.xlane.xlu0 %663
        %665 = vadd.xlane.f32.xlu0 %v567
        %v666 = vpop.xlane.xlu0 %665
        %667 = vadd.xlane.f32.xlu0 %v570
        %v668 = vpop.xlane.xlu0 %667
        %669 = vadd.xlane.f32.xlu0 %v575
        %v670 = vpop.xlane.xlu0 %669
        %671 = vadd.xlane.f32.xlu0 %v578
        %v672 = vpop.xlane.xlu0 %671
        %673 = vadd.xlane.f32.xlu0 %v583
        %v674 = vpop.xlane.xlu0 %673
        %675 = vadd.xlane.f32.xlu0 %v586
        %v676 = vpop.xlane.xlu0 %675
        %677 = vadd.xlane.f32.xlu0 %v591
        %v678 = vpop.xlane.xlu0 %677
        %679 = vadd.xlane.f32.xlu0 %v594
        %v680 = vpop.xlane.xlu0 %679
        %681 = vadd.xlane.f32.xlu0 %v599
        %v682 = vpop.xlane.xlu0 %681
        %683 = vadd.xlane.f32.xlu0 %v602
        %v684 = vpop.xlane.xlu0 %683
        %685 = vadd.xlane.f32.xlu0 %v607
        %v686 = vpop.xlane.xlu0 %685
        %687 = vadd.xlane.f32.xlu0 %v610
        %v688 = vpop.xlane.xlu0 %687
        %689 = vadd.xlane.f32.xlu0 %v615
        %v690 = vpop.xlane.xlu0 %689
        %691 = vadd.xlane.f32.xlu0 %v618
        %v692 = vpop.xlane.xlu0 %691
        %693 = vadd.xlane.f32.xlu0 %v623
        %v694 = vpop.xlane.xlu0 %693
        %695 = vadd.xlane.f32.xlu0 %v626
        %v696 = vpop.xlane.xlu0 %695
        %697 = vadd.xlane.f32.xlu0 %v631
        %v698 = vpop.xlane.xlu0 %697
        %699 = vadd.xlane.f32.xlu0 %v634
        %v700 = vpop.xlane.xlu0 %699
        %v701 = vrcp.pop 128.0
        %v702 = vmul.f32 %v638, %v701
        %v703 = vmul.f32 %v640, %v701
        %v704 = vmul.f32 %v642, %v701
        %v705 = vmul.f32 %v644, %v701
        %v706 = vmul.f32 %v646, %v701
        %v707 = vmul.f32 %v648, %v701
        %v708 = vmul.f32 %v650, %v701
        %v709 = vmul.f32 %v652, %v701
        %v710 = vmul.f32 %v654, %v701
        %v711 = vmul.f32 %v656, %v701
        %v712 = vmul.f32 %v658, %v701
        %v713 = vmul.f32 %v660, %v701
        %v714 = vmul.f32 %v662, %v701
        %v715 = vmul.f32 %v664, %v701
        %v716 = vmul.f32 %v666, %v701
        %v717 = vmul.f32 %v668, %v701
        %v718 = vmul.f32 %v670, %v701
        %v719 = vmul.f32 %v672, %v701
        %v720 = vmul.f32 %v674, %v701
        %v721 = vmul.f32 %v676, %v701
        %v722 = vmul.f32 %v678, %v701
        %v723 = vmul.f32 %v680, %v701
        %v724 = vmul.f32 %v682, %v701
        %v725 = vmul.f32 %v684, %v701
        %v726 = vmul.f32 %v686, %v701
        %v727 = vmul.f32 %v688, %v701
        %v728 = vmul.f32 %v690, %v701
        %v729 = vmul.f32 %v692, %v701
        %v730 = vmul.f32 %v694, %v701
        %v731 = vmul.f32 %v696, %v701
        %v732 = vmul.f32 %v698, %v701
        %v733 = vmul.f32 %v700, %v701
        %v734 = vsub.f32 %v511, %v702
        %v735 = vsub.f32 %v514, %v703
        %v736 = vsub.f32 %v519, %v704
        %v737 = vsub.f32 %v522, %v705
        %v738 = vsub.f32 %v527, %v706
        %v739 = vsub.f32 %v530, %v707
        %v740 = vsub.f32 %v535, %v708
        %v741 = vsub.f32 %v538, %v709
        %v742 = vsub.f32 %v543, %v710
        %v743 = vsub.f32 %v546, %v711
        %v744 = vsub.f32 %v551, %v712
        %v745 = vsub.f32 %v554, %v713
        %v746 = vsub.f32 %v559, %v714
        %v747 = vsub.f32 %v562, %v715
        %v748 = vsub.f32 %v567, %v716
        %v749 = vsub.f32 %v570, %v717
        %v750 = vsub.f32 %v575, %v718
        %v751 = vsub.f32 %v578, %v719
        %v752 = vsub.f32 %v583, %v720
        %v753 = vsub.f32 %v586, %v721
        %v754 = vsub.f32 %v591, %v722
        %v755 = vsub.f32 %v594, %v723
        %v756 = vsub.f32 %v599, %v724
        %v757 = vsub.f32 %v602, %v725
        %v758 = vsub.f32 %v607, %v726
        %v759 = vsub.f32 %v610, %v727
        %v760 = vsub.f32 %v615, %v728
        %v761 = vsub.f32 %v618, %v729
        %v762 = vsub.f32 %v623, %v730
        %v763 = vsub.f32 %v626, %v731
        %v764 = vsub.f32 %v631, %v732
        %v765 = vsub.f32 %v634, %v733
        %v766 = vmul.f32 %v734, %v734
        %v767 = vmul.f32 %v735, %v735
        %v768 = vmul.f32 %v736, %v736
        %v769 = vmul.f32 %v737, %v737
        %v770 = vmul.f32 %v738, %v738
        %v771 = vmul.f32 %v739, %v739
        %v772 = vmul.f32 %v740, %v740
        %v773 = vmul.f32 %v741, %v741
        %v774 = vmul.f32 %v742, %v742
        %v775 = vmul.f32 %v743, %v743
        %v776 = vmul.f32 %v744, %v744
        %v777 = vmul.f32 %v745, %v745
        %v778 = vmul.f32 %v746, %v746
        %v779 = vmul.f32 %v747, %v747
        %v780 = vmul.f32 %v748, %v748
        %v781 = vmul.f32 %v749, %v749
        %v782 = vmul.f32 %v750, %v750
        %v783 = vmul.f32 %v751, %v751
        %v784 = vmul.f32 %v752, %v752
        %v785 = vmul.f32 %v753, %v753
        %v786 = vmul.f32 %v754, %v754
        %v787 = vmul.f32 %v755, %v755
        %v788 = vmul.f32 %v756, %v756
        %v789 = vmul.f32 %v757, %v757
        %v790 = vmul.f32 %v758, %v758
        %v791 = vmul.f32 %v759, %v759
        %v792 = vmul.f32 %v760, %v760
        %v793 = vmul.f32 %v761, %v761
        %v794 = vmul.f32 %v762, %v762
        %v795 = vmul.f32 %v763, %v763
        %v796 = vmul.f32 %v764, %v764
        %v797 = vmul.f32 %v765, %v765
        %798 = vadd.xlane.f32.xlu0 %v766
        %v799 = vpop.xlane.xlu0 %798
        %800 = vadd.xlane.f32.xlu0 %v767
        %v801 = vpop.xlane.xlu0 %800
        %802 = vadd.xlane.f32.xlu0 %v768
        %v803 = vpop.xlane.xlu0 %802
        %804 = vadd.xlane.f32.xlu0 %v769
        %v805 = vpop.xlane.xlu0 %804
        %806 = vadd.xlane.f32.xlu0 %v770
        %v807 = vpop.xlane.xlu0 %806
        %808 = vadd.xlane.f32.xlu0 %v771
        %v809 = vpop.xlane.xlu0 %808
        %810 = vadd.xlane.f32.xlu0 %v772
        %v811 = vpop.xlane.xlu0 %810
        %812 = vadd.xlane.f32.xlu0 %v773
        %v813 = vpop.xlane.xlu0 %812
        %814 = vadd.xlane.f32.xlu0 %v774
        %v815 = vpop.xlane.xlu0 %814
        %816 = vadd.xlane.f32.xlu0 %v775
        %v817 = vpop.xlane.xlu0 %816
        %818 = vadd.xlane.f32.xlu0 %v776
        %v819 = vpop.xlane.xlu0 %818
        %820 = vadd.xlane.f32.xlu0 %v777
        %v821 = vpop.xlane.xlu0 %820
        %822 = vadd.xlane.f32.xlu0 %v778
        %v823 = vpop.xlane.xlu0 %822
        %824 = vadd.xlane.f32.xlu0 %v779
        %v825 = vpop.xlane.xlu0 %824
        %826 = vadd.xlane.f32.xlu0 %v780
        %v827 = vpop.xlane.xlu0 %826
        %828 = vadd.xlane.f32.xlu0 %v781
        %v829 = vpop.xlane.xlu0 %828
        %830 = vadd.xlane.f32.xlu0 %v782
        %v831 = vpop.xlane.xlu0 %830
        %832 = vadd.xlane.f32.xlu0 %v783
        %v833 = vpop.xlane.xlu0 %832
        %834 = vadd.xlane.f32.xlu0 %v784
        %v835 = vpop.xlane.xlu0 %834
        %836 = vadd.xlane.f32.xlu0 %v785
        %v837 = vpop.xlane.xlu0 %836
        %838 = vadd.xlane.f32.xlu0 %v786
        %v839 = vpop.xlane.xlu0 %838
        %840 = vadd.xlane.f32.xlu0 %v787
        %v841 = vpop.xlane.xlu0 %840
        %842 = vadd.xlane.f32.xlu0 %v788
        %v843 = vpop.xlane.xlu0 %842
        %844 = vadd.xlane.f32.xlu0 %v789
        %v845 = vpop.xlane.xlu0 %844
        %846 = vadd.xlane.f32.xlu0 %v790
        %v847 = vpop.xlane.xlu0 %846
        %848 = vadd.xlane.f32.xlu0 %v791
        %v849 = vpop.xlane.xlu0 %848
        %850 = vadd.xlane.f32.xlu0 %v792
        %v851 = vpop.xlane.xlu0 %850
        %852 = vadd.xlane.f32.xlu0 %v793
        %v853 = vpop.xlane.xlu0 %852
        %854 = vadd.xlane.f32.xlu0 %v794
        %v855 = vpop.xlane.xlu0 %854
        %856 = vadd.xlane.f32.xlu0 %v795
        %v857 = vpop.xlane.xlu0 %856
        %858 = vadd.xlane.f32.xlu0 %v796
        %v859 = vpop.xlane.xlu0 %858
        %860 = vadd.xlane.f32.xlu0 %v797
        %v861 = vpop.xlane.xlu0 %860
        %v862 = vmul.f32 %v799, %v701
        %v863 = vmul.f32 %v801, %v701
        %v864 = vmul.f32 %v803, %v701
        %v865 = vmul.f32 %v805, %v701
        %v866 = vmul.f32 %v807, %v701
        %v867 = vmul.f32 %v809, %v701
        %v868 = vmul.f32 %v811, %v701
        %v869 = vmul.f32 %v813, %v701
        %v870 = vmul.f32 %v815, %v701
        %v871 = vmul.f32 %v817, %v701
        %v872 = vmul.f32 %v819, %v701
        %v873 = vmul.f32 %v821, %v701
        %v874 = vmul.f32 %v823, %v701
        %v875 = vmul.f32 %v825, %v701
        %v876 = vmul.f32 %v827, %v701
        %v877 = vmul.f32 %v829, %v701
        %v878 = vmul.f32 %v831, %v701
        %v879 = vmul.f32 %v833, %v701
        %v880 = vmul.f32 %v835, %v701
        %v881 = vmul.f32 %v837, %v701
        %v882 = vmul.f32 %v839, %v701
        %v883 = vmul.f32 %v841, %v701
        %v884 = vmul.f32 %v843, %v701
        %v885 = vmul.f32 %v845, %v701
        %v886 = vmul.f32 %v847, %v701
        %v887 = vmul.f32 %v849, %v701
        %v888 = vmul.f32 %v851, %v701
        %v889 = vmul.f32 %v853, %v701
        %v890 = vmul.f32 %v855, %v701
        %v891 = vmul.f32 %v857, %v701
        %v892 = vmul.f32 %v859, %v701
        %v893 = vmul.f32 %v861, %v701
        %v894 = vadd.f32 %v862, 1e-06
        %v895 = vadd.f32 %v863, 1e-06
        %v896 = vadd.f32 %v864, 1e-06
        %v897 = vadd.f32 %v865, 1e-06
        %v898 = vadd.f32 %v866, 1e-06
        %v899 = vadd.f32 %v867, 1e-06
        %v900 = vadd.f32 %v868, 1e-06
        %v901 = vadd.f32 %v869, 1e-06
        %v902 = vadd.f32 %v870, 1e-06
        %v903 = vadd.f32 %v871, 1e-06
        %v904 = vadd.f32 %v872, 1e-06
        %v905 = vadd.f32 %v873, 1e-06
        %v906 = vadd.f32 %v874, 1e-06
        %v907 = vadd.f32 %v875, 1e-06
        %v908 = vadd.f32 %v876, 1e-06
        %v909 = vadd.f32 %v877, 1e-06
        %v910 = vadd.f32 %v878, 1e-06
        %v911 = vadd.f32 %v879, 1e-06
        %v912 = vadd.f32 %v880, 1e-06
        %v913 = vadd.f32 %v881, 1e-06
        %v914 = vadd.f32 %v882, 1e-06
        %v915 = vadd.f32 %v883, 1e-06
        %v916 = vadd.f32 %v884, 1e-06
        %v917 = vadd.f32 %v885, 1e-06
        %v918 = vadd.f32 %v886, 1e-06
        %v919 = vadd.f32 %v887, 1e-06
        %v920 = vadd.f32 %v888, 1e-06
        %v921 = vadd.f32 %v889, 1e-06
        %v922 = vadd.f32 %v890, 1e-06
        %v923 = vadd.f32 %v891, 1e-06
        %v924 = vadd.f32 %v892, 1e-06
        %v925 = vadd.f32 %v893, 1e-06
        %v926 = vrsqrt.pop %v894
        %v927 = vrsqrt.pop %v895
        %v928 = vrsqrt.pop %v896
        %v929 = vrsqrt.pop %v897
        %v930 = vrsqrt.pop %v898
        %v931 = vrsqrt.pop %v899
        %v932 = vrsqrt.pop %v900
        %v933 = vrsqrt.pop %v901
        %v934 = vrsqrt.pop %v902
        %v935 = vrsqrt.pop %v903
        %v936 = vrsqrt.pop %v904
        %v937 = vrsqrt.pop %v905
        %v938 = vrsqrt.pop %v906
        %v939 = vrsqrt.pop %v907
        %v940 = vrsqrt.pop %v908
        %v941 = vrsqrt.pop %v909
        %v942 = vrsqrt.pop %v910
        %v943 = vrsqrt.pop %v911
        %v944 = vrsqrt.pop %v912
        %v945 = vrsqrt.pop %v913
        %v946 = vrsqrt.pop %v914
        %v947 = vrsqrt.pop %v915
        %v948 = vrsqrt.pop %v916
        %v949 = vrsqrt.pop %v917
        %v950 = vrsqrt.pop %v918
        %v951 = vrsqrt.pop %v919
        %v952 = vrsqrt.pop %v920
        %v953 = vrsqrt.pop %v921
        %v954 = vrsqrt.pop %v922
        %v955 = vrsqrt.pop %v923
        %v956 = vrsqrt.pop %v924
        %v957 = vrsqrt.pop %v925
        %v958 = vmul.f32 %v734, %v926
        %v959 = vmul.f32 %v735, %v927
        %v960 = vmul.f32 %v736, %v928
        %v961 = vmul.f32 %v737, %v929
        %v962 = vmul.f32 %v738, %v930
        %v963 = vmul.f32 %v739, %v931
        %v964 = vmul.f32 %v740, %v932
        %v965 = vmul.f32 %v741, %v933
        %v966 = vmul.f32 %v742, %v934
        %v967 = vmul.f32 %v743, %v935
        %v968 = vmul.f32 %v744, %v936
        %v969 = vmul.f32 %v745, %v937
        %v970 = vmul.f32 %v746, %v938
        %v971 = vmul.f32 %v747, %v939
        %v972 = vmul.f32 %v748, %v940
        %v973 = vmul.f32 %v749, %v941
        %v974 = vmul.f32 %v750, %v942
        %v975 = vmul.f32 %v751, %v943
        %v976 = vmul.f32 %v752, %v944
        %v977 = vmul.f32 %v753, %v945
        %v978 = vmul.f32 %v754, %v946
        %v979 = vmul.f32 %v755, %v947
        %v980 = vmul.f32 %v756, %v948
        %v981 = vmul.f32 %v757, %v949
        %v982 = vmul.f32 %v758, %v950
        %v983 = vmul.f32 %v759, %v951
        %v984 = vmul.f32 %v760, %v952
        %v985 = vmul.f32 %v761, %v953
        %v986 = vmul.f32 %v762, %v954
        %v987 = vmul.f32 %v763, %v955
        %v988 = vmul.f32 %v764, %v956
        %v989 = vmul.f32 %v765, %v957
        %v990 = vadd.f32 %v958, %v959
        %v991 = vrot.slane %v990, 4
        %v992 = vadd.f32 %v990, %v991
        %v993 = vrot.slane %v992, 2
        %v994 = vadd.f32 %v992, %v993
        %v995 = vrot.slane %v994, 1
        %v996 = vadd.f32 %v994, %v995
        %v997 = vadd.f32 %v960, %v961
        %v998 = vrot.slane %v997, 4
        %v999 = vadd.f32 %v997, %v998
        %v1000 = vrot.slane %v999, 2
        %v1001 = vadd.f32 %v999, %v1000
        %v1002 = vrot.slane %v1001, 1
        %v1003 = vadd.f32 %v1001, %v1002
        %v1004 = vadd.f32 %v962, %v963
        %v1005 = vrot.slane %v1004, 4
        %v1006 = vadd.f32 %v1004, %v1005
        %v1007 = vrot.slane %v1006, 2
        %v1008 = vadd.f32 %v1006, %v1007
        %v1009 = vrot.slane %v1008, 1
        %v1010 = vadd.f32 %v1008, %v1009
        %v1011 = vadd.f32 %v964, %v965
        %v1012 = vrot.slane %v1011, 4
        %v1013 = vadd.f32 %v1011, %v1012
        %v1014 = vrot.slane %v1013, 2
        %v1015 = vadd.f32 %v1013, %v1014
        %v1016 = vrot.slane %v1015, 1
        %v1017 = vadd.f32 %v1015, %v1016
        %v1018 = vadd.f32 %v966, %v967
        %v1019 = vrot.slane %v1018, 4
        %v1020 = vadd.f32 %v1018, %v1019
        %v1021 = vrot.slane %v1020, 2
        %v1022 = vadd.f32 %v1020, %v1021
        %v1023 = vrot.slane %v1022, 1
        %v1024 = vadd.f32 %v1022, %v1023
        %v1025 = vadd.f32 %v968, %v969
        %v1026 = vrot.slane %v1025, 4
        %v1027 = vadd.f32 %v1025, %v1026
        %v1028 = vrot.slane %v1027, 2
        %v1029 = vadd.f32 %v1027, %v1028
        %v1030 = vrot.slane %v1029, 1
        %v1031 = vadd.f32 %v1029, %v1030
        %v1032 = vadd.f32 %v970, %v971
        %v1033 = vrot.slane %v1032, 4
        %v1034 = vadd.f32 %v1032, %v1033
        %v1035 = vrot.slane %v1034, 2
        %v1036 = vadd.f32 %v1034, %v1035
        %v1037 = vrot.slane %v1036, 1
        %v1038 = vadd.f32 %v1036, %v1037
        %v1039 = vadd.f32 %v972, %v973
        %v1040 = vrot.slane %v1039, 4
        %v1041 = vadd.f32 %v1039, %v1040
        %v1042 = vrot.slane %v1041, 2
        %v1043 = vadd.f32 %v1041, %v1042
        %v1044 = vrot.slane %v1043, 1
        %v1045 = vadd.f32 %v1043, %v1044
        %v1046 = vadd.f32 %v974, %v975
        %v1047 = vrot.slane %v1046, 4
        %v1048 = vadd.f32 %v1046, %v1047
        %v1049 = vrot.slane %v1048, 2
        %v1050 = vadd.f32 %v1048, %v1049
        %v1051 = vrot.slane %v1050, 1
        %v1052 = vadd.f32 %v1050, %v1051
        %v1053 = vadd.f32 %v976, %v977
        %v1054 = vrot.slane %v1053, 4
        %v1055 = vadd.f32 %v1053, %v1054
        %v1056 = vrot.slane %v1055, 2
        %v1057 = vadd.f32 %v1055, %v1056
        %v1058 = vrot.slane %v1057, 1
        %v1059 = vadd.f32 %v1057, %v1058
        %v1060 = vadd.f32 %v978, %v979
        %v1061 = vrot.slane %v1060, 4
        %v1062 = vadd.f32 %v1060, %v1061
        %v1063 = vrot.slane %v1062, 2
        %v1064 = vadd.f32 %v1062, %v1063
        %v1065 = vrot.slane %v1064, 1
        %v1066 = vadd.f32 %v1064, %v1065
        %v1067 = vadd.f32 %v980, %v981
        %v1068 = vrot.slane %v1067, 4
        %v1069 = vadd.f32 %v1067, %v1068
        %v1070 = vrot.slane %v1069, 2
        %v1071 = vadd.f32 %v1069, %v1070
        %v1072 = vrot.slane %v1071, 1
        %v1073 = vadd.f32 %v1071, %v1072
        %v1074 = vadd.f32 %v982, %v983
        %v1075 = vrot.slane %v1074, 4
        %v1076 = vadd.f32 %v1074, %v1075
        %v1077 = vrot.slane %v1076, 2
        %v1078 = vadd.f32 %v1076, %v1077
        %v1079 = vrot.slane %v1078, 1
        %v1080 = vadd.f32 %v1078, %v1079
        %v1081 = vadd.f32 %v984, %v985
        %v1082 = vrot.slane %v1081, 4
        %v1083 = vadd.f32 %v1081, %v1082
        %v1084 = vrot.slane %v1083, 2
        %v1085 = vadd.f32 %v1083, %v1084
        %v1086 = vrot.slane %v1085, 1
        %v1087 = vadd.f32 %v1085, %v1086
        %v1088 = vadd.f32 %v986, %v987
        %v1089 = vrot.slane %v1088, 4
        %v1090 = vadd.f32 %v1088, %v1089
        %v1091 = vrot.slane %v1090, 2
        %v1092 = vadd.f32 %v1090, %v1091
        %v1093 = vrot.slane %v1092, 1
        %v1094 = vadd.f32 %v1092, %v1093
        %v1095 = vadd.f32 %v988, %v989
        %v1096 = vrot.slane %v1095, 4
        %v1097 = vadd.f32 %v1095, %v1096
        %v1098 = vrot.slane %v1097, 2
        %v1099 = vadd.f32 %v1097, %v1098
        %v1100 = vrot.slane %v1099, 1
        %v1101 = vadd.f32 %v1099, %v1100
        %v1102 = vmul.f32 %v996, 0.0625
        %v1103 = vmul.f32 %v1003, 0.0625
        %v1104 = vmul.f32 %v1010, 0.0625
        %v1105 = vmul.f32 %v1017, 0.0625
        %v1106 = vmul.f32 %v1024, 0.0625
        %v1107 = vmul.f32 %v1031, 0.0625
        %v1108 = vmul.f32 %v1038, 0.0625
        %v1109 = vmul.f32 %v1045, 0.0625
        %v1110 = vmul.f32 %v1052, 0.0625
        %v1111 = vmul.f32 %v1059, 0.0625
        %v1112 = vmul.f32 %v1066, 0.0625
        %v1113 = vmul.f32 %v1073, 0.0625
        %v1114 = vmul.f32 %v1080, 0.0625
        %v1115 = vmul.f32 %v1087, 0.0625
        %v1116 = vmul.f32 %v1094, 0.0625
        %v1117 = vmul.f32 %v1101, 0.0625
        %v1118 = vld [vmem:[#allocation7] sm:$0xff]
        %v1119 = vld [vmem:[#allocation7 + $0x8] sm:$0xff]
        %v1120 = vld [vmem:[#allocation7 + $0x10] sm:$0xff]
        %v1121 = vld [vmem:[#allocation7 + $0x18] sm:$0xff]
        %v1122 = vld [vmem:[#allocation7 + $0x20] sm:$0xff]
        %v1123 = vld [vmem:[#allocation7 + $0x28] sm:$0xff]
        %v1124 = vld [vmem:[#allocation7 + $0x30] sm:$0xff]
        %v1125 = vld [vmem:[#allocation7 + $0x38] sm:$0xff]
        %v1126 = vld [vmem:[#allocation7 + $0x40] sm:$0xff]
        %v1127 = vld [vmem:[#allocation7 + $0x48] sm:$0xff]
        %v1128 = vld [vmem:[#allocation7 + $0x50] sm:$0xff]
        %v1129 = vld [vmem:[#allocation7 + $0x58] sm:$0xff]
        %v1130 = vld [vmem:[#allocation7 + $0x60] sm:$0xff]
        %v1131 = vld [vmem:[#allocation7 + $0x68] sm:$0xff]
        %v1132 = vld [vmem:[#allocation7 + $0x70] sm:$0xff]
        %v1133 = vld [vmem:[#allocation7 + $0x78] sm:$0xff]
        %v1134 = vld [vmem:[%s4] sm:$0x1]
        %v1136 = vlaneseq
        %v1137 = vshrl.u32 %v1136, 7
        %v1138 = vsub.s32 0, %v1137
        %v1139 = vrot.slane %v1134, %v1138
        %vm1157 = vcmask 1041409
        %v1158 = vsel %vm1157, %v1103, %v1102
        %vm1159 = vcmask 1042434
        %v1160 = vsel %vm1159, %v1104, %v1158
        %vm1161 = vcmask 1043459
        %v1162 = vsel %vm1161, %v1105, %v1160
        %vm1163 = vcmask 1044484
        %v1164 = vsel %vm1163, %v1106, %v1162
        %vm1165 = vcmask 1045509
        %v1166 = vsel %vm1165, %v1107, %v1164
        %vm1167 = vcmask 1046534
        %v1168 = vsel %vm1167, %v1108, %v1166
        %vm1169 = vcmask 1047559
        %v1170 = vsel %vm1169, %v1109, %v1168
        %v1171 = vsel %vm1157, %v1111, %v1110
        %v1172 = vsel %vm1159, %v1112, %v1171
        %v1173 = vsel %vm1161, %v1113, %v1172
        %v1174 = vsel %vm1163, %v1114, %v1173
        %v1175 = vsel %vm1165, %v1115, %v1174
        %v1176 = vsel %vm1167, %v1116, %v1175
        %v1177 = vsel %vm1169, %v1117, %v1176
        %1180 = vmatprep.subr.mxu0 0.0
        %1181 = vmatpush1.msra.mxu0 %v1118
        %1182 = vmatprep.subr.mxu0 0.0
        %1183 = vmatpush1.msra.mxu0 %v1119
        %1184 = vmatprep.subr.mxu0 0.0
        %1185 = vmatpush1.msra.mxu0 %v1120
        %1186 = vmatprep.subr.mxu0 0.0
        %1187 = vmatpush1.msra.mxu0 %v1121
        %1188 = vmatprep.subr.mxu0 0.0
        %1189 = vmatpush1.msra.mxu0 %v1122
        %1190 = vmatprep.subr.mxu0 0.0
        %1191 = vmatpush1.msra.mxu0 %v1123
        %1192 = vmatprep.subr.mxu0 0.0
        %1193 = vmatpush1.msra.mxu0 %v1124
        %1194 = vmatprep.subr.mxu0 0.0
        %1195 = vmatpush1.msra.mxu0 %v1125
        %1196 = vmatprep.subr.mxu0 0.0
        %1197 = vmatpush1.msra.mxu0 %v1126
        %1198 = vmatprep.subr.mxu0 0.0
        %1199 = vmatpush1.msra.mxu0 %v1127
        %1200 = vmatprep.subr.mxu0 0.0
        %1201 = vmatpush1.msra.mxu0 %v1128
        %1202 = vmatprep.subr.mxu0 0.0
        %1203 = vmatpush1.msra.mxu0 %v1129
        %1204 = vmatprep.subr.mxu0 0.0
        %1205 = vmatpush1.msra.mxu0 %v1130
        %1206 = vmatprep.subr.mxu0 0.0
        %1207 = vmatpush1.msra.mxu0 %v1131
        %1208 = vmatprep.subr.mxu0 0.0
        %1209 = vmatpush1.msra.mxu0 %v1132
        %1210 = vmatprep.subr.mxu0 0.0
        %1211 = vmatpush1.msra.mxu0 %v1133
        %1212 = vmatprep.subr.mxu0 0.0
        %1213 = vmatpush1.msra.mxu0 0.0
        %1214 = vmatprep.subr.mxu0 0.0
        %1215 = vmatpush1.msra.mxu0 0.0
        %1216 = vmatprep.subr.mxu0 0.0
        %1217 = vmatpush1.msra.mxu0 0.0
        %1218 = vmatprep.subr.mxu0 0.0
        %1219 = vmatpush1.msra.mxu0 0.0
        %1220 = vmatprep.subr.mxu0 0.0
        %1221 = vmatpush1.msra.mxu0 0.0
        %1222 = vmatprep.subr.mxu0 0.0
        %1223 = vmatpush1.msra.mxu0 0.0
        %1224 = vmatprep.subr.mxu0 0.0
        %1225 = vmatpush1.msra.mxu0 0.0
        %1226 = vmatprep.subr.mxu0 0.0
        %1227 = vmatpush1.msra.mxu0 0.0
        %1228 = vmatprep.subr.mxu0 0.0
        %1229 = vmatpush1.msra.mxu0 0.0
        %1230 = vmatprep.subr.mxu0 0.0
        %1231 = vmatpush1.msra.mxu0 0.0
        %1232 = vmatprep.subr.mxu0 0.0
        %1233 = vmatpush1.msra.mxu0 0.0
        %1234 = vmatprep.subr.mxu0 0.0
        %1235 = vmatpush1.msra.mxu0 0.0
        %1236 = vmatprep.subr.mxu0 0.0
        %1237 = vmatpush1.msra.mxu0 0.0
        %1238 = vmatprep.subr.mxu0 0.0
        %1239 = vmatpush1.msra.mxu0 0.0
        %1240 = vmatprep.subr.mxu0 0.0
        %1241 = vmatpush1.msra.mxu0 0.0
        %1242 = vmatprep.subr.mxu0 0.0
        %1243 = vmatpush1.msra.mxu0 0.0
        %1244 = vmatprep.mubr.f32.mxu0 0.0
        %1245 = vmatmul.mubr.f32.gmra.mrb[0].mxu0 %v1170
        %v1246 = vpop.f32.mrb[0].mxu0
        %v1247 = vadd.f32 %v1139, %v1246
        %v1248 = vpop.f32.mrb[0].mxu0
        %1249 = vmatprep.mubr.f32.mxu0 0.0
        %1250 = vmatmul.mubr.f32.gmra.mrb[0].mxu0 %v1177
        %v1251 = vpop.f32.mrb[0].mxu0
        %v1252 = vadd.f32 %v1139, %v1251
        %v1253 = vpop.f32.mrb[0].mxu0
        %1254 = vdwg.mxu0
        %1255 = vst [vmem:[%s272] sm:$0xff] %v1247
        %1256 = vst [vmem:[%s272 + $0x8] sm:$0xff] %v1252
        %s1257 = sand.u32 %s141, 1
        %s1258 = scalar_lea.sflag [#allocation4], %s1257
        %s1259 = sand.u32 %s141, 1
        %s1260 = smul.addr %s1259, 16
        %s1261 = scalar_lea.vmem [#allocation8], %s1260
        // Predicated region
        $region53: #{tpu_custom_call.1} parent=39 // pred_check
          %p1262 = pneg %p151
        $region54: #{tpu_custom_call.1} parent=39 // pred_check_branch
          %1264 = sbr.rel (%p1262) target = $region56
        $region55: #{tpu_custom_call.1} parent=39 // pred_region
          %s1265 = smul.u32 2, %s23
          %s1267 = ssub.s32 256, 256
          %1268 = vsyncadd %s1258, %s1267
          %s1269 = smul.addr %s1265, 128
          %s1270 = scalar_lea.hbm %s5, %s1269
          %s1271 = sshll.u32 %s1261, 4
          %s1272 = int_to_ptr.vmem [resolvable:$true] %s1271
          %1277 = dma.vmem_to_hbm [thread:$0]  %s1272, 256, %s1270, %s1258, 128, 128, 8
        $region56: #{tpu_custom_call.1} parent=39 // pred_fallthru
          _
      $region40: #{tpu_custom_call.1} parent=5 // pred_fallthru
        _
      %p1278 = scmp.le.s32.totalorder 2, %s18
      // Predicated region
      $region57: #{tpu_custom_call.1} parent=5 // pred_check
        %p1279 = pneg %p1278
      $region58: #{tpu_custom_call.1} parent=5 // pred_check_branch
        %1281 = sbr.rel (%p1279) target = $region60
      $region59: #{tpu_custom_call.1} parent=5 // pred_region
        %s1282 = ssub.s32 %s18, 2
        // Predicated region
        $region61: #{tpu_custom_call.1} parent=59 // pred_check
          %p1283 = pneg %p157
        $region62: #{tpu_custom_call.1} parent=59 // pred_check_branch
          %1285 = sbr.rel (%p1283) target = $region64
        $region63: #{tpu_custom_call.1} parent=59 // pred_region
          %s1286 = sand.u32 %s142, 1
          %s1287 = scalar_lea.sflag [#allocation4], %s1286
          %s1288 = sand.u32 %s142, 1
          %s1289 = smul.addr %s1288, 16
          %s1290 = scalar_lea.vmem [#allocation8], %s1289
          %1291 = dma.done %s1287, 256
        $region64: #{tpu_custom_call.1} parent=59 // pred_fallthru
          _
      $region60: #{tpu_custom_call.1} parent=5 // pred_fallthru
        _
    $region6: #{tpu_custom_call.1} parent=1 // loop_footer
      %s22 = sadd.s32 1, %s18
    $region7: #{tpu_custom_call.1} parent=1 // loop_footer_branch
      %17 = sbr.rel target = $region3
    $region8: #{tpu_custom_call.1} parent=1 // loop_exit
      _
    %1292 = vsyncpa [#allocation3], 1
    %s1293 = scalar_lea.sflag [#allocation3], 1
    %1294 = vsyncpa %s1293, 1
    %1295 = vsyncpa [#allocation6], 1
    %1296 = vsyncpa [#allocation4], 1
    %s1297 = scalar_lea.sflag [#allocation4], 1
    %1298 = vsyncpa %s1297, 1

</llo_original>
